<compile_context>
chip_gen: v7x
topology: tpu7x:2x2x1
jax: 0.10.0
libtpu: 0.0.40
codegen_flags: <defaults>
</compile_context>

<pallas_src>
import functools
import math

import jax
import jax.numpy as jnp
from jax.experimental import pallas as pl
from jax.experimental.pallas import tpu as pltpu

# ----------------------------- tiling helpers -------------------------------

_DEF_TM, _DEF_TN, _DEF_TK = 256, 256, 512
_VMEM_LIMIT = 32 * 1024 * 1024  # safe scoped budget on v5e/v6e/v7x


def _tile(dim, target):
    """Largest tile <= target that evenly divides dim (falls back to divisors)."""
    if dim >= target and dim % target == 0:
        return target
    for t in range(min(target, dim), 0, -1):
        if dim % t == 0:
            return t
    return dim


# ----------------------------- matmul kernels -------------------------------


def _mm_accumulate(x_ref, w_ref, acc_ref, transpose_w=False):
    """bf16 MXU matmul with f32 accumulation into VMEM scratch."""

    @pl.when(pl.program_id(2) == 0)
    def _():
        acc_ref[...] = jnp.zeros_like(acc_ref)

    xb = x_ref[...].astype(jnp.bfloat16)
    wb = w_ref[...].astype(jnp.bfloat16)
    if transpose_w:
        # contract on the last dim of both operands (weight stored [N, K])
        acc_ref[...] += jax.lax.dot_general(
            xb, wb, dimension_numbers=(((1,), (1,)), ((), ())),
            preferred_element_type=jnp.float32)
    else:
        acc_ref[...] += jnp.dot(xb, wb, preferred_element_type=jnp.float32)


def _is_last_k():
    return pl.program_id(2) == pl.num_programs(2) - 1


def _mm_bias_kernel(x_ref, w_ref, b_ref, o_ref, acc_ref):
    _mm_accumulate(x_ref, w_ref, acc_ref)

    @pl.when(_is_last_k())
    def _():
        o_ref[...] = (acc_ref[...] + b_ref[...]).astype(o_ref.dtype)


def _mm_bias_gelu_kernel(x_ref, w_ref, b_ref, o_ref, acc_ref):
    _mm_accumulate(x_ref, w_ref, acc_ref)

    @pl.when(_is_last_k())
    def _():
        z = acc_ref[...] + b_ref[...]
        # GLM/Megatron tanh-approximate gelu (kept in f32; tanh runs on the EUP)
        g = 0.5 * z * (1.0 + jnp.tanh(0.7978845608028654 * z * (1.0 + 0.044715 * z * z)))
        o_ref[...] = g.astype(o_ref.dtype)


def _mm_bias_res_kernel(x_ref, w_ref, b_ref, r_ref, o_ref, acc_ref):
    _mm_accumulate(x_ref, w_ref, acc_ref)

    @pl.when(_is_last_k())
    def _():
        o_ref[...] = (acc_ref[...] + b_ref[...] + r_ref[...]).astype(o_ref.dtype)


def _mm_nt_kernel(x_ref, w_ref, o_ref, acc_ref):
    _mm_accumulate(x_ref, w_ref, acc_ref, transpose_w=True)

    @pl.when(_is_last_k())
    def _():
        o_ref[...] = acc_ref[...].astype(o_ref.dtype)


def _tiled_matmul_call(kernel, x, w, extras, n_out, w_layout="kn"):
    """Shared tiled pallas_call builder.  x:[M,K]; w:[K,N] ('kn') or [N,K] ('nk')."""
    m, k_dim = x.shape
    tm = _tile(m, _DEF_TM)
    tn = _tile(n_out, _DEF_TN)
    tk = _tile(k_dim, _DEF_TK)
    grid = (m // tm, n_out // tn, k_dim // tk)

    if w_layout == "kn":
        w_spec = pl.BlockSpec((tk, tn), lambda i, j, kk: (kk, j))
    else:  # weight stored [N, K]; contraction handled in-kernel (no HBM transpose)
        w_spec = pl.BlockSpec((tn, tk), lambda i, j, kk: (j, kk))

    in_specs = [pl.BlockSpec((tm, tk), lambda i, j, kk: (i, kk)), w_spec]
    operands = [x, w]
    for arr, spec_factory in extras:
        in_specs.append(spec_factory(tm, tn))
        operands.append(arr)

    return pl.pallas_call(
        kernel,
        out_shape=jax.ShapeDtypeStruct((m, n_out), jnp.float32),
        grid=grid,
        in_specs=in_specs,
        out_specs=pl.BlockSpec((tm, tn), lambda i, j, kk: (i, j)),
        scratch_shapes=[pltpu.VMEM((tm, tn), jnp.float32)],
        compiler_params=pltpu.CompilerParams(
            dimension_semantics=("parallel", "parallel", "arbitrary"),
            vmem_limit_bytes=_VMEM_LIMIT,
        ),
    )(*operands)


def _bias_extra(b, n_out):
    return (b.reshape(1, n_out),
            lambda tm, tn: pl.BlockSpec((1, tn), lambda i, j, kk: (0, j)))


def linear_bias(x, w, b):
    n_out = w.shape[1]
    return _tiled_matmul_call(_mm_bias_kernel, x, w, [_bias_extra(b, n_out)], n_out)


def linear_bias_gelu(x, w, b):
    n_out = w.shape[1]
    return _tiled_matmul_call(_mm_bias_gelu_kernel, x, w, [_bias_extra(b, n_out)], n_out)


def linear_bias_residual(x, w, b, residual):
    n_out = w.shape[1]
    extras = [
        _bias_extra(b, n_out),
        (residual, lambda tm, tn: pl.BlockSpec((tm, tn), lambda i, j, kk: (i, j))),
    ]
    return _tiled_matmul_call(_mm_bias_res_kernel, x, w, extras, n_out)


def matmul_nt(x, w_nk):
    """x:[M,K] @ w_nk:[N,K]^T  (logit projection against the word embedding, no transpose)."""
    n_out = w_nk.shape[0]
    return _tiled_matmul_call(_mm_nt_kernel, x, w_nk, [], n_out, w_layout="nk")


# ------------------------------ layernorm kernel ----------------------------


def _layernorm_kernel(x_ref, g_ref, b_ref, o_ref):
    x = x_ref[...].astype(jnp.float32)
    mu = jnp.mean(x, axis=-1, keepdims=True)
    var = jnp.mean(jnp.square(x - mu), axis=-1, keepdims=True)
    y = (x - mu) * jax.lax.rsqrt(var + 1e-5)
    o_ref[...] = (y * g_ref[...] + b_ref[...]).astype(o_ref.dtype)


def layernorm(x, g, b):
    m, h = x.shape
    tm = _tile(m, 256)
    return pl.pallas_call(
        _layernorm_kernel,
        out_shape=jax.ShapeDtypeStruct((m, h), x.dtype),
        grid=(m // tm,),
        in_specs=[
            pl.BlockSpec((tm, h), lambda i: (i, 0)),
            pl.BlockSpec((1, h), lambda i: (0, 0)),
            pl.BlockSpec((1, h), lambda i: (0, 0)),
        ],
        out_specs=pl.BlockSpec((tm, h), lambda i: (i, 0)),
        compiler_params=pltpu.CompilerParams(
            dimension_semantics=("parallel",),
            vmem_limit_bytes=_VMEM_LIMIT,
        ),
    )(x, g, b)


# ------------------------------ attention kernel ----------------------------


def _attention_kernel(q_ref, k_ref, v_ref, m_ref, o_ref):
    # one (batch, head) slice per grid step
    q = q_ref[0, 0].astype(jnp.float32)      # [S, D]
    k = k_ref[0, 0]                          # [S, D]
    v = v_ref[0, 0]                          # [S, D]
    mask = m_ref[0]                          # [S, S] float {0,1}

    scale = 1.0 / math.sqrt(q.shape[-1])
    # contract on D without an explicit transpose of K; bf16 MXU, f32 accumulation
    scores = jax.lax.dot_general(
        (q * scale).astype(jnp.bfloat16), k.astype(jnp.bfloat16),
        dimension_numbers=(((1,), (1,)), ((), ())),
        preferred_element_type=jnp.float32)                      # [S, S]
    # GLM masking (scores*mask - 10000*(1-mask)) for a {0,1} mask == select
    scores = jnp.where(mask > 0.5, scores, -10000.0)
    scores = scores - jnp.max(scores, axis=-1, keepdims=True)
    p = jnp.exp(scores)
    inv = pl.reciprocal(jnp.sum(p, axis=-1, keepdims=True), approx=True)
    p = p * inv
    ctx = jnp.dot(p.astype(jnp.bfloat16), v.astype(jnp.bfloat16),
                  preferred_element_type=jnp.float32)            # [S, D]
    o_ref[0, 0] = ctx.astype(o_ref.dtype)


def attention(q, k, v, mask):
    # q/k/v: [B, NH, S, D]; mask: [Bm, S, S] with Bm in {1, B} (never broadcast over heads)
    bsz, nh, s, d = q.shape
    bm = mask.shape[0]
    mask_map = (lambda b, h: (b, 0, 0)) if bm == bsz else (lambda b, h: (0, 0, 0))
    qkv_spec = pl.BlockSpec((1, 1, s, d), lambda b, h: (b, h, 0, 0))
    return pl.pallas_call(
        _attention_kernel,
        out_shape=jax.ShapeDtypeStruct((bsz, nh, s, d), q.dtype),
        grid=(bsz, nh),
        in_specs=[qkv_spec, qkv_spec, qkv_spec, pl.BlockSpec((1, s, s), mask_map)],
        out_specs=pl.BlockSpec((1, 1, s, d), lambda b, h: (b, h, 0, 0)),
        compiler_params=pltpu.CompilerParams(
            dimension_semantics=("parallel", "parallel"),
            vmem_limit_bytes=_VMEM_LIMIT,
        ),
    )(q, k, v, mask)


# --------------------------- parameter construction -------------------------


def init_params(key, num_layers, vocab_size, hidden_size, max_seq_len):
    keys = jax.random.split(key, 2 + num_layers)
    params = {
        # embeddings kept f32 (gather fidelity); matmul kernels cast tiles to bf16
        "word_emb": 0.02 * jax.random.normal(keys[0], (vocab_size, hidden_size), jnp.float32),
        "pos_emb": 0.02 * jax.random.normal(keys[1], (max_seq_len, hidden_size), jnp.float32),
        "lnf_g": jnp.ones((1, hidden_size), jnp.float32),
        "lnf_b": jnp.zeros((1, hidden_size), jnp.float32),
        "layers": [],
    }
    out_std = 0.02 / math.sqrt(2.0 * num_layers)
    for l in range(num_layers):
        k = jax.random.split(keys[2 + l], 4)
        # weights stored [in, out] in bf16 (halved weight DMA); biases / LN params f32
        params["layers"].append(dict(
            ln1_g=jnp.ones((1, hidden_size), jnp.float32),
            ln1_b=jnp.zeros((1, hidden_size), jnp.float32),
            qkv_w=(0.02 * jax.random.normal(k[0], (hidden_size, 3 * hidden_size),
                                            jnp.float32)).astype(jnp.bfloat16),
            qkv_b=jnp.zeros((3 * hidden_size,), jnp.float32),
            dense_w=(out_std * jax.random.normal(k[1], (hidden_size, hidden_size),
                                                 jnp.float32)).astype(jnp.bfloat16),
            dense_b=jnp.zeros((hidden_size,), jnp.float32),
            ln2_g=jnp.ones((1, hidden_size), jnp.float32),
            ln2_b=jnp.zeros((1, hidden_size), jnp.float32),
            fc1_w=(0.02 * jax.random.normal(k[2], (hidden_size, 4 * hidden_size),
                                            jnp.float32)).astype(jnp.bfloat16),
            fc1_b=jnp.zeros((4 * hidden_size,), jnp.float32),
            fc2_w=(out_std * jax.random.normal(k[3], (4 * hidden_size, hidden_size),
                                               jnp.float32)).astype(jnp.bfloat16),
            fc2_b=jnp.zeros((hidden_size,), jnp.float32),
        ))
    return params


# ------------------------------ forward pass --------------------------------


@functools.partial(jax.jit, static_argnames=("num_heads",))
def glm_forward(params, input_ids, position_ids, attention_mask, num_heads):
    b, s = input_ids.shape
    h = params["word_emb"].shape[1]
    d = h // num_heads

    # embedding lookups (gather glue stays in JAX/XLA, fused under jit)
    words = jnp.take(params["word_emb"], input_ids, axis=0)          # [b, s, h]
    pos = jnp.take(params["pos_emb"], position_ids, axis=0)          # [b, s, h]
    hidden = (words + pos).astype(jnp.float32)

    # mask kept at its natural batch dimension (1 or b); never broadcast over heads
    bm = attention_mask.shape[0]
    mask = attention_mask.reshape(bm, s, s).astype(jnp.float32)

    for layer in params["layers"]:
        x = hidden.reshape(b * s, h)
        # attention block
        ln1 = layernorm(x, layer["ln1_g"], layer["ln1_b"])
        qkv = linear_bias(ln1, layer["qkv_w"], layer["qkv_b"])        # [b*s, 3h]
        # random-init weights -> column ordering (which, head, d) is equivalent to reference
        qkv = qkv.reshape(b, s, 3, num_heads, d)
        q = qkv[:, :, 0].transpose(0, 2, 1, 3)                        # [b, nh, s, d]
        k = qkv[:, :, 1].transpose(0, 2, 1, 3)
        v = qkv[:, :, 2].transpose(0, 2, 1, 3)
        ctx = attention(q, k, v, mask)                                # [b, nh, s, d]
        ctx = ctx.transpose(0, 2, 1, 3).reshape(b * s, h)
        # dense projection with the residual add fused into the matmul epilogue
        ln_in = linear_bias_residual(ctx, layer["dense_w"], layer["dense_b"], x)
        # MLP block: gelu fused into fc1, residual fused into fc2
        ln2 = layernorm(ln_in, layer["ln2_g"], layer["ln2_b"])
        h4 = linear_bias_gelu(ln2, layer["fc1_w"], layer["fc1_b"])
        hidden = linear_bias_residual(h4, layer["fc2_w"], layer["fc2_b"], ln_in)
        hidden = hidden.reshape(b, s, h)

    final = layernorm(hidden.reshape(b * s, h), params["lnf_g"], params["lnf_b"])
    # output_predict: logits = F.linear(hidden, word_embeddings.weight)
    # word_emb stays [V, H]; kernel contracts on H (no HBM transpose)
    logits = matmul_nt(final, params["word_emb"]).reshape(b, s, -1)
    return logits


# ---------------------------------- main -------------------------------------

if __name__ == "__main__":
    NUM_LAYERS = 2
    VOCAB = 128
    HIDDEN = 32
    HEADS = 4
    MAX_SEQ = 16
    BATCH = 2
    SEQ = 8

    key = jax.random.PRNGKey(0)
    k_param, k_ids = jax.random.split(key)

    params = init_params(k_param, NUM_LAYERS, VOCAB, HIDDEN, MAX_SEQ)

    input_ids = jax.random.randint(k_ids, (BATCH, SEQ), 0, VOCAB, dtype=jnp.int32)
    position_ids = jnp.broadcast_to(jnp.arange(SEQ, dtype=jnp.int32), (BATCH, SEQ))
    attention_mask = jnp.tril(jnp.ones((SEQ, SEQ), jnp.float32))[None, None]  # [1,1,S,S]

    logits = glm_forward(params, input_ids, position_ids, attention_mask, HEADS)
    logits = jax.block_until_ready(logits)

    assert logits.shape == (BATCH, SEQ, VOCAB), logits.shape
    assert bool(jnp.all(jnp.isfinite(logits)))
    print("KERNEL_OK")
</pallas_src>

<mosaic_0001>
module attributes {stable_mosaic.version = 11 : i64} {
  func.func @_layernorm_kernel(%arg0: i32, %arg1: memref<16x32xf32, #tpu.memory_space<vmem>>, %arg2: memref<1x32xf32, #tpu.memory_space<vmem>>, %arg3: memref<1x32xf32, #tpu.memory_space<vmem>>, %arg4: memref<16x32xf32, #tpu.memory_space<vmem>>) attributes {dimension_semantics = [#tpu.dimension_semantics<parallel>], iteration_bounds = array<i64: 1>, scalar_prefetch = 0 : i64, scratch_operands = 0 : i64, tpu.core_type = #tpu.core_type<tc>, window_params = [{transform_indices = @transform_0, window_bounds = array<i64: 16, 32>}, {pipeline_mode = #tpu.pipeline_mode<synchronous>, transform_indices = @transform_1, window_bounds = array<i64: 1, 32>}, {pipeline_mode = #tpu.pipeline_mode<synchronous>, transform_indices = @transform_2, window_bounds = array<i64: 1, 32>}, {transform_indices = @transform_3, window_bounds = array<i64: 16, 32>}]} {
    %c0 = arith.constant 0 : index
    %c0_0 = arith.constant 0 : index
    %0 = vector.load %arg1[%c0, %c0_0] : memref<16x32xf32, #tpu.memory_space<vmem>>, vector<16x32xf32>
    %cst = arith.constant dense<0.000000e+00> : vector<16xf32>
    %1 = vector.multi_reduction <add>, %0, %cst [1] : vector<16x32xf32> to vector<16xf32>
    %2 = vector.shape_cast %1 : vector<16xf32> to vector<16x1xf32>
    %cst_1 = arith.constant 3.200000e+01 : f32
    %3 = vector.broadcast %cst_1 : f32 to vector<16x1xf32>
    %4 = arith.divf %2, %3 : vector<16x1xf32>
    %5 = vector.broadcast %4 : vector<16x1xf32> to vector<16x32xf32>
    %6 = arith.subf %0, %5 : vector<16x32xf32>
    %7 = arith.mulf %6, %6 : vector<16x32xf32>
    %cst_2 = arith.constant dense<0.000000e+00> : vector<16xf32>
    %8 = vector.multi_reduction <add>, %7, %cst_2 [1] : vector<16x32xf32> to vector<16xf32>
    %9 = vector.shape_cast %8 : vector<16xf32> to vector<16x1xf32>
    %cst_3 = arith.constant 3.200000e+01 : f32
    %10 = vector.broadcast %cst_3 : f32 to vector<16x1xf32>
    %11 = arith.divf %9, %10 : vector<16x1xf32>
    %12 = vector.broadcast %4 : vector<16x1xf32> to vector<16x32xf32>
    %13 = arith.subf %0, %12 : vector<16x32xf32>
    %cst_4 = arith.constant 9.99999974E-6 : f32
    %14 = vector.broadcast %cst_4 : f32 to vector<16x1xf32>
    %15 = arith.addf %11, %14 : vector<16x1xf32>
    %16 = math.rsqrt %15 : vector<16x1xf32>
    %17 = vector.broadcast %16 : vector<16x1xf32> to vector<16x32xf32>
    %18 = arith.mulf %13, %17 : vector<16x32xf32>
    %c0_5 = arith.constant 0 : index
    %c0_6 = arith.constant 0 : index
    %19 = vector.load %arg2[%c0_5, %c0_6] : memref<1x32xf32, #tpu.memory_space<vmem>>, vector<1x32xf32>
    %20 = vector.broadcast %19 : vector<1x32xf32> to vector<16x32xf32>
    %21 = arith.mulf %18, %20 : vector<16x32xf32>
    %c0_7 = arith.constant 0 : index
    %c0_8 = arith.constant 0 : index
    %22 = vector.load %arg3[%c0_7, %c0_8] : memref<1x32xf32, #tpu.memory_space<vmem>>, vector<1x32xf32>
    %23 = vector.broadcast %22 : vector<1x32xf32> to vector<16x32xf32>
    %24 = arith.addf %21, %23 : vector<16x32xf32>
    %c0_9 = arith.constant 0 : index
    %c0_10 = arith.constant 0 : index
    %25 = vector.load %arg4[%c0_9, %c0_10] : memref<16x32xf32, #tpu.memory_space<vmem>>, vector<16x32xf32>
    tpu.vector_store %arg4[%c0_9, %c0_10], %24 {strides = array<i32>} : memref<16x32xf32, #tpu.memory_space<vmem>>, vector<16x32xf32>,
    return
  }
  func.func @transform_0(%arg0: i32) -> (i32, i32) {
    %c0_i32 = arith.constant 0 : i32
    %c0_i32_0 = arith.constant 0 : i32
    return %arg0, %c0_i32 : i32, i32
  }
  func.func @transform_1(%arg0: i32) -> (i32, i32) {
    %c0_i32 = arith.constant 0 : i32
    %c0_i32_0 = arith.constant 0 : i32
    %c0_i32_1 = arith.constant 0 : i32
    return %c0_i32, %c0_i32_0 : i32, i32
  }
  func.func @transform_2(%arg0: i32) -> (i32, i32) {
    %c0_i32 = arith.constant 0 : i32
    %c0_i32_0 = arith.constant 0 : i32
    %c0_i32_1 = arith.constant 0 : i32
    return %c0_i32, %c0_i32_0 : i32, i32
  }
  func.func @transform_3(%arg0: i32) -> (i32, i32) {
    %c0_i32 = arith.constant 0 : i32
    %c0_i32_0 = arith.constant 0 : i32
    return %arg0, %c0_i32 : i32, i32
  }
}

module attributes {stable_mosaic.version = 11 : i64} {
  func.func @_mm_bias_kernel(%arg0: i32, %arg1: i32, %arg2: i32, %arg3: memref<16x32xf32, #tpu.memory_space<vmem>>, %arg4: memref<32x96xbf16, #tpu.memory_space<vmem>>, %arg5: memref<1x96xf32, #tpu.memory_space<vmem>>, %arg6: memref<16x96xf32, #tpu.memory_space<vmem>>, %arg7: memref<16x96xf32, #tpu.memory_space<vmem>>) attributes {dimension_semantics = [#tpu.dimension_semantics<parallel>, #tpu.dimension_semantics<parallel>, #tpu.dimension_semantics<arbitrary>], iteration_bounds = array<i64: 1, 1, 1>, scalar_prefetch = 0 : i64, scratch_operands = 1 : i64, tpu.core_type = #tpu.core_type<tc>, window_params = [{transform_indices = @transform_0, window_bounds = array<i64: 16, 32>}, {transform_indices = @transform_1, window_bounds = array<i64: 32, 96>}, {transform_indices = @transform_2, window_bounds = array<i64: 1, 96>}, {transform_indices = @transform_3, window_bounds = array<i64: 16, 96>}]} {
    %c0_i32 = arith.constant 0 : i32
    %0 = arith.cmpi eq, %arg2, %c0_i32 : i32
    %1 = arith.extui %0 : i1 to i32
    %c0_i32_0 = arith.constant 0 : i32
    %2 = arith.cmpi ne, %1, %c0_i32_0 : i32
    scf.if %2 {
      %cst_10 = arith.constant 0.000000e+00 : f32
      %13 = vector.broadcast %cst_10 : f32 to vector<16x96xf32>
      %c0_11 = arith.constant 0 : index
      %c0_12 = arith.constant 0 : index
      %14 = vector.load %arg7[%c0_11, %c0_12] : memref<16x96xf32, #tpu.memory_space<vmem>>, vector<16x96xf32>
      tpu.vector_store %arg7[%c0_11, %c0_12], %13 {strides = array<i32>} : memref<16x96xf32, #tpu.memory_space<vmem>>, vector<16x96xf32>,
    } else {
    }
    %c0 = arith.constant 0 : index
    %c0_1 = arith.constant 0 : index
    %3 = vector.load %arg3[%c0, %c0_1] : memref<16x32xf32, #tpu.memory_space<vmem>>, vector<16x32xf32>
    %4 = arith.truncf %3 : vector<16x32xf32> to vector<16x32xbf16>
    %c0_2 = arith.constant 0 : index
    %c0_3 = arith.constant 0 : index
    %5 = vector.load %arg4[%c0_2, %c0_3] : memref<32x96xbf16, #tpu.memory_space<vmem>>, vector<32x96xbf16>
    %c0_4 = arith.constant 0 : index
    %c0_5 = arith.constant 0 : index
    %6 = vector.load %arg7[%c0_4, %c0_5] : memref<16x96xf32, #tpu.memory_space<vmem>>, vector<16x96xf32>
    %cst = arith.constant dense<0.000000e+00> : vector<16x96xf32>
    %7 = tpu.matmul %4, %5, %cst {dimension_numbers = #tpu.dot_dimension_numbers<[1], [0], [0], [1], [0, 0, 1, 1], [], []>} : vector<16x32xbf16>, vector<32x96xbf16>, vector<16x96xf32> -> vector<16x96xf32>
    %8 = arith.addf %6, %7 : vector<16x96xf32>
    %c0_6 = arith.constant 0 : index
    %c0_7 = arith.constant 0 : index
    %9 = vector.load %arg7[%c0_6, %c0_7] : memref<16x96xf32, #tpu.memory_space<vmem>>, vector<16x96xf32>
    tpu.vector_store %arg7[%c0_6, %c0_7], %8 {strides = array<i32>} : memref<16x96xf32, #tpu.memory_space<vmem>>, vector<16x96xf32>,
    %c0_i32_8 = arith.constant 0 : i32
    %10 = arith.cmpi eq, %arg2, %c0_i32_8 : i32
    %11 = arith.extui %10 : i1 to i32
    %c0_i32_9 = arith.constant 0 : i32
    %12 = arith.cmpi ne, %11, %c0_i32_9 : i32
    scf.if %12 {
      %c0_10 = arith.constant 0 : index
      %c0_11 = arith.constant 0 : index
      %13 = vector.load %arg7[%c0_10, %c0_11] : memref<16x96xf32, #tpu.memory_space<vmem>>, vector<16x96xf32>
      %c0_12 = arith.constant 0 : index
      %c0_13 = arith.constant 0 : index
      %14 = vector.load %arg5[%c0_12, %c0_13] : memref<1x96xf32, #tpu.memory_space<vmem>>, vector<1x96xf32>
      %15 = vector.broadcast %14 : vector<1x96xf32> to vector<16x96xf32>
      %16 = arith.addf %13, %15 : vector<16x96xf32>
      %c0_14 = arith.constant 0 : index
      %c0_15 = arith.constant 0 : index
      %17 = vector.load %arg6[%c0_14, %c0_15] : memref<16x96xf32, #tpu.memory_space<vmem>>, vector<16x96xf32>
      tpu.vector_store %arg6[%c0_14, %c0_15], %16 {strides = array<i32>} : memref<16x96xf32, #tpu.memory_space<vmem>>, vector<16x96xf32>,
    } else {
    }
    return
  }
  func.func @transform_0(%arg0: i32, %arg1: i32, %arg2: i32) -> (i32, i32) {
    %c0_i32 = arith.constant 0 : i32
    return %arg0, %arg2 : i32, i32
  }
  func.func @transform_1(%arg0: i32, %arg1: i32, %arg2: i32) -> (i32, i32) {
    %c0_i32 = arith.constant 0 : i32
    return %arg2, %arg1 : i32, i32
  }
  func.func @transform_2(%arg0: i32, %arg1: i32, %arg2: i32) -> (i32, i32) {
    %c0_i32 = arith.constant 0 : i32
    %c0_i32_0 = arith.constant 0 : i32
    return %c0_i32, %arg1 : i32, i32
  }
  func.func @transform_3(%arg0: i32, %arg1: i32, %arg2: i32) -> (i32, i32) {
    %c0_i32 = arith.constant 0 : i32
    return %arg0, %arg1 : i32, i32
  }
}

module attributes {stable_mosaic.version = 11 : i64} {
  func.func @_attention_kernel(%arg0: i32, %arg1: i32, %arg2: memref<1x1x8x8xf32, #tpu.memory_space<vmem>>, %arg3: memref<1x1x8x8xf32, #tpu.memory_space<vmem>>, %arg4: memref<1x1x8x8xf32, #tpu.memory_space<vmem>>, %arg5: memref<1x8x8xf32, #tpu.memory_space<vmem>>, %arg6: memref<1x1x8x8xf32, #tpu.memory_space<vmem>>) attributes {dimension_semantics = [#tpu.dimension_semantics<parallel>, #tpu.dimension_semantics<parallel>], iteration_bounds = array<i64: 2, 4>, scalar_prefetch = 0 : i64, scratch_operands = 0 : i64, tpu.core_type = #tpu.core_type<tc>, window_params = [{transform_indices = @transform_0, window_bounds = array<i64: 1, 1, 8, 8>}, {transform_indices = @transform_1, window_bounds = array<i64: 1, 1, 8, 8>}, {transform_indices = @transform_2, window_bounds = array<i64: 1, 1, 8, 8>}, {pipeline_mode = #tpu.pipeline_mode<synchronous>, transform_indices = @transform_3, window_bounds = array<i64: 1, 8, 8>}, {transform_indices = @transform_4, window_bounds = array<i64: 1, 1, 8, 8>}]} {
    %c0 = arith.constant 0 : index
    %c0_0 = arith.constant 0 : index
    %c0_1 = arith.constant 0 : index
    %c0_2 = arith.constant 0 : index
    %0 = vector.load %arg2[%c0, %c0_0, %c0_1, %c0_2] : memref<1x1x8x8xf32, #tpu.memory_space<vmem>>, vector<1x1x8x8xf32>
    %1 = vector.shape_cast %0 : vector<1x1x8x8xf32> to vector<8x8xf32>
    %c0_3 = arith.constant 0 : index
    %c0_4 = arith.constant 0 : index
    %c0_5 = arith.constant 0 : index
    %c0_6 = arith.constant 0 : index
    %2 = vector.load %arg3[%c0_3, %c0_4, %c0_5, %c0_6] : memref<1x1x8x8xf32, #tpu.memory_space<vmem>>, vector<1x1x8x8xf32>
    %3 = vector.shape_cast %2 : vector<1x1x8x8xf32> to vector<8x8xf32>
    %c0_7 = arith.constant 0 : index
    %c0_8 = arith.constant 0 : index
    %c0_9 = arith.constant 0 : index
    %c0_10 = arith.constant 0 : index
    %4 = vector.load %arg4[%c0_7, %c0_8, %c0_9, %c0_10] : memref<1x1x8x8xf32, #tpu.memory_space<vmem>>, vector<1x1x8x8xf32>
    %5 = vector.shape_cast %4 : vector<1x1x8x8xf32> to vector<8x8xf32>
    %c0_11 = arith.constant 0 : index
    %c0_12 = arith.constant 0 : index
    %c0_13 = arith.constant 0 : index
    %6 = vector.load %arg5[%c0_11, %c0_12, %c0_13] : memref<1x8x8xf32, #tpu.memory_space<vmem>>, vector<1x8x8xf32>
    %7 = vector.shape_cast %6 : vector<1x8x8xf32> to vector<8x8xf32>
    %cst = arith.constant 0.353553385 : f32
    %8 = vector.broadcast %cst : f32 to vector<8x8xf32>
    %9 = arith.mulf %1, %8 : vector<8x8xf32>
    %10 = arith.truncf %9 : vector<8x8xf32> to vector<8x8xbf16>
    %11 = arith.truncf %3 : vector<8x8xf32> to vector<8x8xbf16>
    %cst_14 = arith.constant dense<0.000000e+00> : vector<8x8xf32>
    %12 = tpu.matmul %10, %11, %cst_14 {dimension_numbers = #tpu.dot_dimension_numbers<[1], [1], [0], [0], [0, 0, 1, 0], [], []>} : vector<8x8xbf16>, vector<8x8xbf16>, vector<8x8xf32> -> vector<8x8xf32>
    %cst_15 = arith.constant 5.000000e-01 : f32
    %13 = vector.broadcast %cst_15 : f32 to vector<8x8xf32>
    %14 = arith.cmpf ogt, %7, %13 : vector<8x8xf32>
    %cst_16 = arith.constant -1.000000e+04 : f32
    %15 = vector.broadcast %cst_16 : f32 to vector<8x8xf32>
    %16 = arith.select %14, %12, %15 : vector<8x8xi1>, vector<8x8xf32>
    %cst_17 = arith.constant dense<0xFF800000> : vector<8xf32>
    %17 = vector.multi_reduction <maximumf>, %16, %cst_17 [1] : vector<8x8xf32> to vector<8xf32>
    %18 = vector.shape_cast %17 : vector<8xf32> to vector<8x1xf32>
    %19 = vector.broadcast %18 : vector<8x1xf32> to vector<8x8xf32>
    %20 = arith.subf %16, %19 : vector<8x8xf32>
    %21 = math.exp %20 : vector<8x8xf32>
    %cst_18 = arith.constant dense<0.000000e+00> : vector<8xf32>
    %22 = vector.multi_reduction <add>, %21, %cst_18 [1] : vector<8x8xf32> to vector<8xf32>
    %23 = vector.shape_cast %22 : vector<8xf32> to vector<8x1xf32>
    %24 = tpu.reciprocal %23 {approx = true} : vector<8x1xf32> -> vector<8x1xf32>
    %25 = vector.broadcast %24 : vector<8x1xf32> to vector<8x8xf32>
    %26 = arith.mulf %21, %25 : vector<8x8xf32>
    %27 = arith.truncf %26 : vector<8x8xf32> to vector<8x8xbf16>
    %28 = arith.truncf %5 : vector<8x8xf32> to vector<8x8xbf16>
    %cst_19 = arith.constant dense<0.000000e+00> : vector<8x8xf32>
    %29 = tpu.matmul %27, %28, %cst_19 {dimension_numbers = #tpu.dot_dimension_numbers<[1], [0], [0], [1], [0, 0, 1, 1], [], []>} : vector<8x8xbf16>, vector<8x8xbf16>, vector<8x8xf32> -> vector<8x8xf32>
    %c0_20 = arith.constant 0 : index
    %c0_21 = arith.constant 0 : index
    %c0_22 = arith.constant 0 : index
    %c0_23 = arith.constant 0 : index
    %30 = vector.load %arg6[%c0_20, %c0_21, %c0_22, %c0_23] : memref<1x1x8x8xf32, #tpu.memory_space<vmem>>, vector<1x1x8x8xf32>
    %31 = vector.shape_cast %30 : vector<1x1x8x8xf32> to vector<8x8xf32>
    %32 = vector.shape_cast %29 : vector<8x8xf32> to vector<1x1x8x8xf32>
    tpu.vector_store %arg6[%c0_20, %c0_21, %c0_22, %c0_23], %32 {strides = array<i32>} : memref<1x1x8x8xf32, #tpu.memory_space<vmem>>, vector<1x1x8x8xf32>,
    return
  }
  func.func @transform_0(%arg0: i32, %arg1: i32) -> (i32, i32, i32, i32) {
    %c0_i32 = arith.constant 0 : i32
    %c0_i32_0 = arith.constant 0 : i32
    %c0_i32_1 = arith.constant 0 : i32
    return %arg0, %arg1, %c0_i32, %c0_i32_0 : i32, i32, i32, i32
  }
  func.func @transform_1(%arg0: i32, %arg1: i32) -> (i32, i32, i32, i32) {
    %c0_i32 = arith.constant 0 : i32
    %c0_i32_0 = arith.constant 0 : i32
    %c0_i32_1 = arith.constant 0 : i32
    return %arg0, %arg1, %c0_i32, %c0_i32_0 : i32, i32, i32, i32
  }
  func.func @transform_2(%arg0: i32, %arg1: i32) -> (i32, i32, i32, i32) {
    %c0_i32 = arith.constant 0 : i32
    %c0_i32_0 = arith.constant 0 : i32
    %c0_i32_1 = arith.constant 0 : i32
    return %arg0, %arg1, %c0_i32, %c0_i32_0 : i32, i32, i32, i32
  }
  func.func @transform_3(%arg0: i32, %arg1: i32) -> (i32, i32, i32) {
    %c0_i32 = arith.constant 0 : i32
    %c0_i32_0 = arith.constant 0 : i32
    %c0_i32_1 = arith.constant 0 : i32
    %c0_i32_2 = arith.constant 0 : i32
    return %c0_i32, %c0_i32_0, %c0_i32_1 : i32, i32, i32
  }
  func.func @transform_4(%arg0: i32, %arg1: i32) -> (i32, i32, i32, i32) {
    %c0_i32 = arith.constant 0 : i32
    %c0_i32_0 = arith.constant 0 : i32
    %c0_i32_1 = arith.constant 0 : i32
    return %arg0, %arg1, %c0_i32, %c0_i32_0 : i32, i32, i32, i32
  }
}

module attributes {stable_mosaic.version = 11 : i64} {
  func.func @_mm_bias_res_kernel(%arg0: i32, %arg1: i32, %arg2: i32, %arg3: memref<16x32xf32, #tpu.memory_space<vmem>>, %arg4: memref<32x32xbf16, #tpu.memory_space<vmem>>, %arg5: memref<1x32xf32, #tpu.memory_space<vmem>>, %arg6: memref<16x32xf32, #tpu.memory_space<vmem>>, %arg7: memref<16x32xf32, #tpu.memory_space<vmem>>, %arg8: memref<16x32xf32, #tpu.memory_space<vmem>>) attributes {dimension_semantics = [#tpu.dimension_semantics<parallel>, #tpu.dimension_semantics<parallel>, #tpu.dimension_semantics<arbitrary>], iteration_bounds = array<i64: 1, 1, 1>, scalar_prefetch = 0 : i64, scratch_operands = 1 : i64, tpu.core_type = #tpu.core_type<tc>, window_params = [{transform_indices = @transform_0, window_bounds = array<i64: 16, 32>}, {transform_indices = @transform_1, window_bounds = array<i64: 32, 32>}, {transform_indices = @transform_2, window_bounds = array<i64: 1, 32>}, {transform_indices = @transform_3, window_bounds = array<i64: 16, 32>}, {transform_indices = @transform_4, window_bounds = array<i64: 16, 32>}]} {
    %c0_i32 = arith.constant 0 : i32
    %0 = arith.cmpi eq, %arg2, %c0_i32 : i32
    %1 = arith.extui %0 : i1 to i32
    %c0_i32_0 = arith.constant 0 : i32
    %2 = arith.cmpi ne, %1, %c0_i32_0 : i32
    scf.if %2 {
      %cst_10 = arith.constant 0.000000e+00 : f32
      %13 = vector.broadcast %cst_10 : f32 to vector<16x32xf32>
      %c0_11 = arith.constant 0 : index
      %c0_12 = arith.constant 0 : index
      %14 = vector.load %arg8[%c0_11, %c0_12] : memref<16x32xf32, #tpu.memory_space<vmem>>, vector<16x32xf32>
      tpu.vector_store %arg8[%c0_11, %c0_12], %13 {strides = array<i32>} : memref<16x32xf32, #tpu.memory_space<vmem>>, vector<16x32xf32>,
    } else {
    }
    %c0 = arith.constant 0 : index
    %c0_1 = arith.constant 0 : index
    %3 = vector.load %arg3[%c0, %c0_1] : memref<16x32xf32, #tpu.memory_space<vmem>>, vector<16x32xf32>
    %4 = arith.truncf %3 : vector<16x32xf32> to vector<16x32xbf16>
    %c0_2 = arith.constant 0 : index
    %c0_3 = arith.constant 0 : index
    %5 = vector.load %arg4[%c0_2, %c0_3] : memref<32x32xbf16, #tpu.memory_space<vmem>>, vector<32x32xbf16>
    %c0_4 = arith.constant 0 : index
    %c0_5 = arith.constant 0 : index
    %6 = vector.load %arg8[%c0_4, %c0_5] : memref<16x32xf32, #tpu.memory_space<vmem>>, vector<16x32xf32>
    %cst = arith.constant dense<0.000000e+00> : vector<16x32xf32>
    %7 = tpu.matmul %4, %5, %cst {dimension_numbers = #tpu.dot_dimension_numbers<[1], [0], [0], [1], [0, 0, 1, 1], [], []>} : vector<16x32xbf16>, vector<32x32xbf16>, vector<16x32xf32> -> vector<16x32xf32>
    %8 = arith.addf %6, %7 : vector<16x32xf32>
    %c0_6 = arith.constant 0 : index
    %c0_7 = arith.constant 0 : index
    %9 = vector.load %arg8[%c0_6, %c0_7] : memref<16x32xf32, #tpu.memory_space<vmem>>, vector<16x32xf32>
    tpu.vector_store %arg8[%c0_6, %c0_7], %8 {strides = array<i32>} : memref<16x32xf32, #tpu.memory_space<vmem>>, vector<16x32xf32>,
    %c0_i32_8 = arith.constant 0 : i32
    %10 = arith.cmpi eq, %arg2, %c0_i32_8 : i32
    %11 = arith.extui %10 : i1 to i32
    %c0_i32_9 = arith.constant 0 : i32
    %12 = arith.cmpi ne, %11, %c0_i32_9 : i32
    scf.if %12 {
      %c0_10 = arith.constant 0 : index
      %c0_11 = arith.constant 0 : index
      %13 = vector.load %arg8[%c0_10, %c0_11] : memref<16x32xf32, #tpu.memory_space<vmem>>, vector<16x32xf32>
      %c0_12 = arith.constant 0 : index
      %c0_13 = arith.constant 0 : index
      %14 = vector.load %arg5[%c0_12, %c0_13] : memref<1x32xf32, #tpu.memory_space<vmem>>, vector<1x32xf32>
      %15 = vector.broadcast %14 : vector<1x32xf32> to vector<16x32xf32>
      %16 = arith.addf %13, %15 : vector<16x32xf32>
      %c0_14 = arith.constant 0 : index
      %c0_15 = arith.constant 0 : index
      %17 = vector.load %arg6[%c0_14, %c0_15] : memref<16x32xf32, #tpu.memory_space<vmem>>, vector<16x32xf32>
      %18 = arith.addf %16, %17 : vector<16x32xf32>
      %c0_16 = arith.constant 0 : index
      %c0_17 = arith.constant 0 : index
      %19 = vector.load %arg7[%c0_16, %c0_17] : memref<16x32xf32, #tpu.memory_space<vmem>>, vector<16x32xf32>
      tpu.vector_store %arg7[%c0_16, %c0_17], %18 {strides = array<i32>} : memref<16x32xf32, #tpu.memory_space<vmem>>, vector<16x32xf32>,
    } else {
    }
    return
  }
  func.func @transform_0(%arg0: i32, %arg1: i32, %arg2: i32) -> (i32, i32) {
    %c0_i32 = arith.constant 0 : i32
    return %arg0, %arg2 : i32, i32
  }
  func.func @transform_1(%arg0: i32, %arg1: i32, %arg2: i32) -> (i32, i32) {
    %c0_i32 = arith.constant 0 : i32
    return %arg2, %arg1 : i32, i32
  }
  func.func @transform_2(%arg0: i32, %arg1: i32, %arg2: i32) -> (i32, i32) {
    %c0_i32 = arith.constant 0 : i32
    %c0_i32_0 = arith.constant 0 : i32
    return %c0_i32, %arg1 : i32, i32
  }
  func.func @transform_3(%arg0: i32, %arg1: i32, %arg2: i32) -> (i32, i32) {
    %c0_i32 = arith.constant 0 : i32
    return %arg0, %arg1 : i32, i32
  }
  func.func @transform_4(%arg0: i32, %arg1: i32, %arg2: i32) -> (i32, i32) {
    %c0_i32 = arith.constant 0 : i32
    return %arg0, %arg1 : i32, i32
  }
}

module attributes {stable_mosaic.version = 11 : i64} {
  func.func @_mm_nt_kernel(%arg0: i32, %arg1: i32, %arg2: i32, %arg3: memref<16x32xf32, #tpu.memory_space<vmem>>, %arg4: memref<128x32xf32, #tpu.memory_space<vmem>>, %arg5: memref<16x128xf32, #tpu.memory_space<vmem>>, %arg6: memref<16x128xf32, #tpu.memory_space<vmem>>) attributes {dimension_semantics = [#tpu.dimension_semantics<parallel>, #tpu.dimension_semantics<parallel>, #tpu.dimension_semantics<arbitrary>], iteration_bounds = array<i64: 1, 1, 1>, scalar_prefetch = 0 : i64, scratch_operands = 1 : i64, tpu.core_type = #tpu.core_type<tc>, window_params = [{transform_indices = @transform_0, window_bounds = array<i64: 16, 32>}, {transform_indices = @transform_1, window_bounds = array<i64: 128, 32>}, {transform_indices = @transform_2, window_bounds = array<i64: 16, 128>}]} {
    %c0_i32 = arith.constant 0 : i32
    %0 = arith.cmpi eq, %arg2, %c0_i32 : i32
    %1 = arith.extui %0 : i1 to i32
    %c0_i32_0 = arith.constant 0 : i32
    %2 = arith.cmpi ne, %1, %c0_i32_0 : i32
    scf.if %2 {
      %cst_10 = arith.constant 0.000000e+00 : f32
      %14 = vector.broadcast %cst_10 : f32 to vector<16x128xf32>
      %c0_11 = arith.constant 0 : index
      %c0_12 = arith.constant 0 : index
      %15 = vector.load %arg6[%c0_11, %c0_12] : memref<16x128xf32, #tpu.memory_space<vmem>>, vector<16x128xf32>
      tpu.vector_store %arg6[%c0_11, %c0_12], %14 {strides = array<i32>} : memref<16x128xf32, #tpu.memory_space<vmem>>, vector<16x128xf32>,
    } else {
    }
    %c0 = arith.constant 0 : index
    %c0_1 = arith.constant 0 : index
    %3 = vector.load %arg3[%c0, %c0_1] : memref<16x32xf32, #tpu.memory_space<vmem>>, vector<16x32xf32>
    %4 = arith.truncf %3 : vector<16x32xf32> to vector<16x32xbf16>
    %c0_2 = arith.constant 0 : index
    %c0_3 = arith.constant 0 : index
    %5 = vector.load %arg4[%c0_2, %c0_3] : memref<128x32xf32, #tpu.memory_space<vmem>>, vector<128x32xf32>
    %6 = arith.truncf %5 : vector<128x32xf32> to vector<128x32xbf16>
    %c0_4 = arith.constant 0 : index
    %c0_5 = arith.constant 0 : index
    %7 = vector.load %arg6[%c0_4, %c0_5] : memref<16x128xf32, #tpu.memory_space<vmem>>, vector<16x128xf32>
    %cst = arith.constant dense<0.000000e+00> : vector<16x128xf32>
    %8 = tpu.matmul %4, %6, %cst {dimension_numbers = #tpu.dot_dimension_numbers<[1], [1], [0], [0], [0, 0, 1, 0], [], []>} : vector<16x32xbf16>, vector<128x32xbf16>, vector<16x128xf32> -> vector<16x128xf32>
    %9 = arith.addf %7, %8 : vector<16x128xf32>
    %c0_6 = arith.constant 0 : index
    %c0_7 = arith.constant 0 : index
    %10 = vector.load %arg6[%c0_6, %c0_7] : memref<16x128xf32, #tpu.memory_space<vmem>>, vector<16x128xf32>
    tpu.vector_store %arg6[%c0_6, %c0_7], %9 {strides = array<i32>} : memref<16x128xf32, #tpu.memory_space<vmem>>, vector<16x128xf32>,
    %c0_i32_8 = arith.constant 0 : i32
    %11 = arith.cmpi eq, %arg2, %c0_i32_8 : i32
    %12 = arith.extui %11 : i1 to i32
    %c0_i32_9 = arith.constant 0 : i32
    %13 = arith.cmpi ne, %12, %c0_i32_9 : i32
    scf.if %13 {
      %c0_10 = arith.constant 0 : index
      %c0_11 = arith.constant 0 : index
      %14 = vector.load %arg6[%c0_10, %c0_11] : memref<16x128xf32, #tpu.memory_space<vmem>>, vector<16x128xf32>
      %c0_12 = arith.constant 0 : index
      %c0_13 = arith.constant 0 : index
      %15 = vector.load %arg5[%c0_12, %c0_13] : memref<16x128xf32, #tpu.memory_space<vmem>>, vector<16x128xf32>
      tpu.vector_store %arg5[%c0_12, %c0_13], %14 {strides = array<i32>} : memref<16x128xf32, #tpu.memory_space<vmem>>, vector<16x128xf32>,
    } else {
    }
    return
  }
  func.func @transform_0(%arg0: i32, %arg1: i32, %arg2: i32) -> (i32, i32) {
    %c0_i32 = arith.constant 0 : i32
    return %arg0, %arg2 : i32, i32
  }
  func.func @transform_1(%arg0: i32, %arg1: i32, %arg2: i32) -> (i32, i32) {
    %c0_i32 = arith.constant 0 : i32
    return %arg1, %arg2 : i32, i32
  }
  func.func @transform_2(%arg0: i32, %arg1: i32, %arg2: i32) -> (i32, i32) {
    %c0_i32 = arith.constant 0 : i32
    return %arg0, %arg1 : i32, i32
  }
}

module attributes {stable_mosaic.version = 11 : i64} {
  func.func @_mm_bias_gelu_kernel(%arg0: i32, %arg1: i32, %arg2: i32, %arg3: memref<16x32xf32, #tpu.memory_space<vmem>>, %arg4: memref<32x128xbf16, #tpu.memory_space<vmem>>, %arg5: memref<1x128xf32, #tpu.memory_space<vmem>>, %arg6: memref<16x128xf32, #tpu.memory_space<vmem>>, %arg7: memref<16x128xf32, #tpu.memory_space<vmem>>) attributes {dimension_semantics = [#tpu.dimension_semantics<parallel>, #tpu.dimension_semantics<parallel>, #tpu.dimension_semantics<arbitrary>], iteration_bounds = array<i64: 1, 1, 1>, scalar_prefetch = 0 : i64, scratch_operands = 1 : i64, tpu.core_type = #tpu.core_type<tc>, window_params = [{transform_indices = @transform_0, window_bounds = array<i64: 16, 32>}, {transform_indices = @transform_1, window_bounds = array<i64: 32, 128>}, {transform_indices = @transform_2, window_bounds = array<i64: 1, 128>}, {transform_indices = @transform_3, window_bounds = array<i64: 16, 128>}]} {
    %c0_i32 = arith.constant 0 : i32
    %0 = arith.cmpi eq, %arg2, %c0_i32 : i32
    %1 = arith.extui %0 : i1 to i32
    %c0_i32_0 = arith.constant 0 : i32
    %2 = arith.cmpi ne, %1, %c0_i32_0 : i32
    scf.if %2 {
      %cst_10 = arith.constant 0.000000e+00 : f32
      %13 = vector.broadcast %cst_10 : f32 to vector<16x128xf32>
      %c0_11 = arith.constant 0 : index
      %c0_12 = arith.constant 0 : index
      %14 = vector.load %arg7[%c0_11, %c0_12] : memref<16x128xf32, #tpu.memory_space<vmem>>, vector<16x128xf32>
      tpu.vector_store %arg7[%c0_11, %c0_12], %13 {strides = array<i32>} : memref<16x128xf32, #tpu.memory_space<vmem>>, vector<16x128xf32>,
    } else {
    }
    %c0 = arith.constant 0 : index
    %c0_1 = arith.constant 0 : index
    %3 = vector.load %arg3[%c0, %c0_1] : memref<16x32xf32, #tpu.memory_space<vmem>>, vector<16x32xf32>
    %4 = arith.truncf %3 : vector<16x32xf32> to vector<16x32xbf16>
    %c0_2 = arith.constant 0 : index
    %c0_3 = arith.constant 0 : index
    %5 = vector.load %arg4[%c0_2, %c0_3] : memref<32x128xbf16, #tpu.memory_space<vmem>>, vector<32x128xbf16>
    %c0_4 = arith.constant 0 : index
    %c0_5 = arith.constant 0 : index
    %6 = vector.load %arg7[%c0_4, %c0_5] : memref<16x128xf32, #tpu.memory_space<vmem>>, vector<16x128xf32>
    %cst = arith.constant dense<0.000000e+00> : vector<16x128xf32>
    %7 = tpu.matmul %4, %5, %cst {dimension_numbers = #tpu.dot_dimension_numbers<[1], [0], [0], [1], [0, 0, 1, 1], [], []>} : vector<16x32xbf16>, vector<32x128xbf16>, vector<16x128xf32> -> vector<16x128xf32>
    %8 = arith.addf %6, %7 : vector<16x128xf32>
    %c0_6 = arith.constant 0 : index
    %c0_7 = arith.constant 0 : index
    %9 = vector.load %arg7[%c0_6, %c0_7] : memref<16x128xf32, #tpu.memory_space<vmem>>, vector<16x128xf32>
    tpu.vector_store %arg7[%c0_6, %c0_7], %8 {strides = array<i32>} : memref<16x128xf32, #tpu.memory_space<vmem>>, vector<16x128xf32>,
    %c0_i32_8 = arith.constant 0 : i32
    %10 = arith.cmpi eq, %arg2, %c0_i32_8 : i32
    %11 = arith.extui %10 : i1 to i32
    %c0_i32_9 = arith.constant 0 : i32
    %12 = arith.cmpi ne, %11, %c0_i32_9 : i32
    scf.if %12 {
      %c0_10 = arith.constant 0 : index
      %c0_11 = arith.constant 0 : index
      %13 = vector.load %arg7[%c0_10, %c0_11] : memref<16x128xf32, #tpu.memory_space<vmem>>, vector<16x128xf32>
      %c0_12 = arith.constant 0 : index
      %c0_13 = arith.constant 0 : index
      %14 = vector.load %arg5[%c0_12, %c0_13] : memref<1x128xf32, #tpu.memory_space<vmem>>, vector<1x128xf32>
      %15 = vector.broadcast %14 : vector<1x128xf32> to vector<16x128xf32>
      %16 = arith.addf %13, %15 : vector<16x128xf32>
      %cst_14 = arith.constant 5.000000e-01 : f32
      %17 = vector.broadcast %cst_14 : f32 to vector<16x128xf32>
      %18 = arith.mulf %17, %16 : vector<16x128xf32>
      %cst_15 = arith.constant 0.797884583 : f32
      %19 = vector.broadcast %cst_15 : f32 to vector<16x128xf32>
      %20 = arith.mulf %19, %16 : vector<16x128xf32>
      %cst_16 = arith.constant 4.471500e-02 : f32
      %21 = vector.broadcast %cst_16 : f32 to vector<16x128xf32>
      %22 = arith.mulf %21, %16 : vector<16x128xf32>
      %23 = arith.mulf %22, %16 : vector<16x128xf32>
      %cst_17 = arith.constant 1.000000e+00 : f32
      %24 = vector.broadcast %cst_17 : f32 to vector<16x128xf32>
      %25 = arith.addf %24, %23 : vector<16x128xf32>
      %26 = arith.mulf %20, %25 : vector<16x128xf32>
      %27 = math.tanh %26 : vector<16x128xf32>
      %cst_18 = arith.constant 1.000000e+00 : f32
      %28 = vector.broadcast %cst_18 : f32 to vector<16x128xf32>
      %29 = arith.addf %28, %27 : vector<16x128xf32>
      %30 = arith.mulf %18, %29 : vector<16x128xf32>
      %c0_19 = arith.constant 0 : index
      %c0_20 = arith.constant 0 : index
      %31 = vector.load %arg6[%c0_19, %c0_20] : memref<16x128xf32, #tpu.memory_space<vmem>>, vector<16x128xf32>
      tpu.vector_store %arg6[%c0_19, %c0_20], %30 {strides = array<i32>} : memref<16x128xf32, #tpu.memory_space<vmem>>, vector<16x128xf32>,
    } else {
    }
    return
  }
  func.func @transform_0(%arg0: i32, %arg1: i32, %arg2: i32) -> (i32, i32) {
    %c0_i32 = arith.constant 0 : i32
    return %arg0, %arg2 : i32, i32
  }
  func.func @transform_1(%arg0: i32, %arg1: i32, %arg2: i32) -> (i32, i32) {
    %c0_i32 = arith.constant 0 : i32
    return %arg2, %arg1 : i32, i32
  }
  func.func @transform_2(%arg0: i32, %arg1: i32, %arg2: i32) -> (i32, i32) {
    %c0_i32 = arith.constant 0 : i32
    %c0_i32_0 = arith.constant 0 : i32
    return %c0_i32, %arg1 : i32, i32
  }
  func.func @transform_3(%arg0: i32, %arg1: i32, %arg2: i32) -> (i32, i32) {
    %c0_i32 = arith.constant 0 : i32
    return %arg0, %arg1 : i32, i32
  }
}

module attributes {stable_mosaic.version = 11 : i64} {
  func.func @_mm_bias_res_kernel(%arg0: i32, %arg1: i32, %arg2: i32, %arg3: memref<16x128xf32, #tpu.memory_space<vmem>>, %arg4: memref<128x32xbf16, #tpu.memory_space<vmem>>, %arg5: memref<1x32xf32, #tpu.memory_space<vmem>>, %arg6: memref<16x32xf32, #tpu.memory_space<vmem>>, %arg7: memref<16x32xf32, #tpu.memory_space<vmem>>, %arg8: memref<16x32xf32, #tpu.memory_space<vmem>>) attributes {dimension_semantics = [#tpu.dimension_semantics<parallel>, #tpu.dimension_semantics<parallel>, #tpu.dimension_semantics<arbitrary>], iteration_bounds = array<i64: 1, 1, 1>, scalar_prefetch = 0 : i64, scratch_operands = 1 : i64, tpu.core_type = #tpu.core_type<tc>, window_params = [{transform_indices = @transform_0, window_bounds = array<i64: 16, 128>}, {transform_indices = @transform_1, window_bounds = array<i64: 128, 32>}, {transform_indices = @transform_2, window_bounds = array<i64: 1, 32>}, {transform_indices = @transform_3, window_bounds = array<i64: 16, 32>}, {transform_indices = @transform_4, window_bounds = array<i64: 16, 32>}]} {
    %c0_i32 = arith.constant 0 : i32
    %0 = arith.cmpi eq, %arg2, %c0_i32 : i32
    %1 = arith.extui %0 : i1 to i32
    %c0_i32_0 = arith.constant 0 : i32
    %2 = arith.cmpi ne, %1, %c0_i32_0 : i32
    scf.if %2 {
      %cst_10 = arith.constant 0.000000e+00 : f32
      %13 = vector.broadcast %cst_10 : f32 to vector<16x32xf32>
      %c0_11 = arith.constant 0 : index
      %c0_12 = arith.constant 0 : index
      %14 = vector.load %arg8[%c0_11, %c0_12] : memref<16x32xf32, #tpu.memory_space<vmem>>, vector<16x32xf32>
      tpu.vector_store %arg8[%c0_11, %c0_12], %13 {strides = array<i32>} : memref<16x32xf32, #tpu.memory_space<vmem>>, vector<16x32xf32>,
    } else {
    }
    %c0 = arith.constant 0 : index
    %c0_1 = arith.constant 0 : index
    %3 = vector.load %arg3[%c0, %c0_1] : memref<16x128xf32, #tpu.memory_space<vmem>>, vector<16x128xf32>
    %4 = arith.truncf %3 : vector<16x128xf32> to vector<16x128xbf16>
    %c0_2 = arith.constant 0 : index
    %c0_3 = arith.constant 0 : index
    %5 = vector.load %arg4[%c0_2, %c0_3] : memref<128x32xbf16, #tpu.memory_space<vmem>>, vector<128x32xbf16>
    %c0_4 = arith.constant 0 : index
    %c0_5 = arith.constant 0 : index
    %6 = vector.load %arg8[%c0_4, %c0_5] : memref<16x32xf32, #tpu.memory_space<vmem>>, vector<16x32xf32>
    %cst = arith.constant dense<0.000000e+00> : vector<16x32xf32>
    %7 = tpu.matmul %4, %5, %cst {dimension_numbers = #tpu.dot_dimension_numbers<[1], [0], [0], [1], [0, 0, 1, 1], [], []>} : vector<16x128xbf16>, vector<128x32xbf16>, vector<16x32xf32> -> vector<16x32xf32>
    %8 = arith.addf %6, %7 : vector<16x32xf32>
    %c0_6 = arith.constant 0 : index
    %c0_7 = arith.constant 0 : index
    %9 = vector.load %arg8[%c0_6, %c0_7] : memref<16x32xf32, #tpu.memory_space<vmem>>, vector<16x32xf32>
    tpu.vector_store %arg8[%c0_6, %c0_7], %8 {strides = array<i32>} : memref<16x32xf32, #tpu.memory_space<vmem>>, vector<16x32xf32>,
    %c0_i32_8 = arith.constant 0 : i32
    %10 = arith.cmpi eq, %arg2, %c0_i32_8 : i32
    %11 = arith.extui %10 : i1 to i32
    %c0_i32_9 = arith.constant 0 : i32
    %12 = arith.cmpi ne, %11, %c0_i32_9 : i32
    scf.if %12 {
      %c0_10 = arith.constant 0 : index
      %c0_11 = arith.constant 0 : index
      %13 = vector.load %arg8[%c0_10, %c0_11] : memref<16x32xf32, #tpu.memory_space<vmem>>, vector<16x32xf32>
      %c0_12 = arith.constant 0 : index
      %c0_13 = arith.constant 0 : index
      %14 = vector.load %arg5[%c0_12, %c0_13] : memref<1x32xf32, #tpu.memory_space<vmem>>, vector<1x32xf32>
      %15 = vector.broadcast %14 : vector<1x32xf32> to vector<16x32xf32>
      %16 = arith.addf %13, %15 : vector<16x32xf32>
      %c0_14 = arith.constant 0 : index
      %c0_15 = arith.constant 0 : index
      %17 = vector.load %arg6[%c0_14, %c0_15] : memref<16x32xf32, #tpu.memory_space<vmem>>, vector<16x32xf32>
      %18 = arith.addf %16, %17 : vector<16x32xf32>
      %c0_16 = arith.constant 0 : index
      %c0_17 = arith.constant 0 : index
      %19 = vector.load %arg7[%c0_16, %c0_17] : memref<16x32xf32, #tpu.memory_space<vmem>>, vector<16x32xf32>
      tpu.vector_store %arg7[%c0_16, %c0_17], %18 {strides = array<i32>} : memref<16x32xf32, #tpu.memory_space<vmem>>, vector<16x32xf32>,
    } else {
    }
    return
  }
  func.func @transform_0(%arg0: i32, %arg1: i32, %arg2: i32) -> (i32, i32) {
    %c0_i32 = arith.constant 0 : i32
    return %arg0, %arg2 : i32, i32
  }
  func.func @transform_1(%arg0: i32, %arg1: i32, %arg2: i32) -> (i32, i32) {
    %c0_i32 = arith.constant 0 : i32
    return %arg2, %arg1 : i32, i32
  }
  func.func @transform_2(%arg0: i32, %arg1: i32, %arg2: i32) -> (i32, i32) {
    %c0_i32 = arith.constant 0 : i32
    %c0_i32_0 = arith.constant 0 : i32
    return %c0_i32, %arg1 : i32, i32
  }
  func.func @transform_3(%arg0: i32, %arg1: i32, %arg2: i32) -> (i32, i32) {
    %c0_i32 = arith.constant 0 : i32
    return %arg0, %arg1 : i32, i32
  }
  func.func @transform_4(%arg0: i32, %arg1: i32, %arg2: i32) -> (i32, i32) {
    %c0_i32 = arith.constant 0 : i32
    return %arg0, %arg1 : i32, i32
  }
}

</mosaic_0001>

<llo_original>
// kernel: glm_forward.19
$region0: #{glm_forward.19}
  #allocation0 [shape = 'u32[]', space=smem, size = 0x4, offset = 0x4, fixed_abs, tag = 'smem constant byte address 0x4 - core index']
  #allocation1 [shape = 'u32[144,128]{1,0:T(1,128)}', space=vmem, size = 0x12000, scoped, tag = 'internal scratch']
  #allocation2 [shape = 'f32[16,32]{1,0:T(8,128)}', space=vmem, size = 0x2000, scoped, tag = 'scratch operand']
  %s0 = inlined_call_operand.vmem [shape: f32[16,32], index: 0, kind: input, shape index: {}]
  %s1 = inlined_call_operand.vmem [shape: bf16[32,32], index: 1, kind: input, shape index: {}]
  %s2 = inlined_call_operand.vmem [shape: f32[1,32], index: 2, kind: input, shape index: {}]
  %s3 = inlined_call_operand.vmem [shape: f32[16,32], index: 3, kind: input, shape index: {}]
  %s4 = inlined_call_operand.vmem [shape: f32[16,32], index: 4, kind: output, shape index: {}]
  %s5 = sld [smem:[#allocation0]]
  $region34: #{glm_forward.19} parent=0
    _
  %s7 = ssub.s32 1, %s5
  %s8 = scalar_select 0, %s7, %s5
  // Predicated region
  $region2: #{glm_forward.19} parent=0 // pred_check
    _
  $region3: #{glm_forward.19} parent=0 // pred_check_branch
    %10 = sbr.rel (0) target = $region5
  $region4: #{glm_forward.19} parent=0 // pred_region
    _
  $region5: #{glm_forward.19} parent=0 // pred_fallthru
    _
  // Predicated region
  $region6: #{glm_forward.19} parent=0 // pred_check
    _
  $region7: #{glm_forward.19} parent=0 // pred_check_branch
    %12 = sbr.rel (0) target = $region9
  $region8: #{glm_forward.19} parent=0 // pred_region
    _
  $region9: #{glm_forward.19} parent=0 // pred_fallthru
    _
  // Predicated region
  $region10: #{glm_forward.19} parent=0 // pred_check
    _
  $region11: #{glm_forward.19} parent=0 // pred_check_branch
    %14 = sbr.rel (0) target = $region13
  $region12: #{glm_forward.19} parent=0 // pred_region
    _
  $region13: #{glm_forward.19} parent=0 // pred_fallthru
    _
  // Predicated region
  $region14: #{glm_forward.19} parent=0 // pred_check
    _
  $region15: #{glm_forward.19} parent=0 // pred_check_branch
    %16 = sbr.rel (0) target = $region17
  $region16: #{glm_forward.19} parent=0 // pred_region
    _
  $region17: #{glm_forward.19} parent=0 // pred_fallthru
    _
  %p18 = scmp.eq.s32.totalorder 0, 0
  // Predicated region
  $region18: #{glm_forward.19} parent=0 // pred_check
    %p19 = pneg %p18
  $region19: #{glm_forward.19} parent=0 // pred_check_branch
    %21 = sbr.rel (%p19) target = $region21
  $region20: #{glm_forward.19} parent=0 // pred_region
    %vm22 = vcmask 261120
    %23 = vst.msk [vmem:[#allocation2] sm:$0xff] %vm22, 0.0
    %24 = vst.msk [vmem:[#allocation2 + $0x8] sm:$0xff] %vm22, 0.0
  $region21: #{glm_forward.19} parent=0 // pred_fallthru
    _
  %v25 = vld [vmem:[%s0] sm:$0xff]
  %v26 = vld [vmem:[%s0 + $0x8] sm:$0xff]
  %v27 = vpack.c.bf16 %v26, %v25
  %v28 = vld [vmem:[%s1] sm:$0xf]
  %v29 = vld [vmem:[%s1 + $0x4] sm:$0xf]
  %v30 = vld [vmem:[%s1 + $0x8] sm:$0xf]
  %v31 = vld [vmem:[%s1 + $0xc] sm:$0xf]
  %v32 = vld [vmem:[#allocation2] sm:$0xff]
  %v33 = vld [vmem:[#allocation2 + $0x8] sm:$0xff]
  %v38 = vunpack.c.l.b16 %v28
  %v39 = vunpack.c.l.b16 %v29
  %v40 = vunpack.c.l.b16 %v30
  %v41 = vunpack.c.l.b16 %v31
  %v42 = vpack.c.b16 %v39, %v38
  %v43 = vpack.c.b16 %v41, %v40
  %vm46 = vcmask 261120
  %v48 = vsel %vm46, %v27, 0
  %50 = vmatprep.subr.bf16.mxu0 0
  %51 = vmatpush1.bf16.msra.mxu0 %v42
  %52 = vmatprep.subr.bf16.mxu0 0
  %53 = vmatpush1.bf16.msra.mxu0 %v43
  %54 = vmatprep.subr.bf16.mxu0 0
  %55 = vmatpush1.bf16.msra.mxu0 0
  %56 = vmatprep.subr.bf16.mxu0 0
  %57 = vmatpush1.bf16.msra.mxu0 0
  %58 = vmatprep.subr.bf16.mxu0 0
  %59 = vmatpush1.bf16.msra.mxu0 0
  %60 = vmatprep.subr.bf16.mxu0 0
  %61 = vmatpush1.bf16.msra.mxu0 0
  %62 = vmatprep.subr.bf16.mxu0 0
  %63 = vmatpush1.bf16.msra.mxu0 0
  %64 = vmatprep.subr.bf16.mxu0 0
  %65 = vmatpush1.bf16.msra.mxu0 0
  %66 = vmatprep.subr.bf16.mxu0 0
  %67 = vmatpush1.bf16.msra.mxu0 0
  %68 = vmatprep.subr.bf16.mxu0 0
  %69 = vmatpush1.bf16.msra.mxu0 0
  %70 = vmatprep.subr.bf16.mxu0 0
  %71 = vmatpush1.bf16.msra.mxu0 0
  %72 = vmatprep.subr.bf16.mxu0 0
  %73 = vmatpush1.bf16.msra.mxu0 0
  %74 = vmatprep.subr.bf16.mxu0 0
  %75 = vmatpush1.bf16.msra.mxu0 0
  %76 = vmatprep.subr.bf16.mxu0 0
  %77 = vmatpush1.bf16.msra.mxu0 0
  %78 = vmatprep.subr.bf16.mxu0 0
  %79 = vmatpush1.bf16.msra.mxu0 0
  %80 = vmatprep.subr.bf16.mxu0 0
  %81 = vmatpush1.bf16.msra.mxu0 0
  %82 = vmatprep.mubr.bf16.mxu0 0
  %83 = vmatmul.mubr.bf16.gmra.mrb[0].mxu0 %v48
  %v84 = vpop.f32.mrb[0].mxu0
  %v85 = vadd.f32 0.0, %v84
  %v86 = vpop.f32.mrb[0].mxu0
  %v87 = vpop.f32.mrb[0].mxu0
  %v88 = vadd.f32 0.0, %v87
  %v89 = vpop.f32.mrb[0].mxu0
  %90 = vdwg.mxu0
  %v91 = vadd.f32 %v32, %v85
  %v92 = vadd.f32 %v33, %v88
  %93 = vst.msk [vmem:[#allocation2] sm:$0xff] %vm46, %v91
  %94 = vst.msk [vmem:[#allocation2 + $0x8] sm:$0xff] %vm46, %v92
  // Predicated region
  $region22: #{glm_forward.19} parent=0 // pred_check
    %p95 = pneg %p18
  $region23: #{glm_forward.19} parent=0 // pred_check_branch
    %97 = sbr.rel (%p95) target = $region25
  $region24: #{glm_forward.19} parent=0 // pred_region
    %v98 = vld [vmem:[#allocation2] sm:$0xff]
    %v99 = vld [vmem:[#allocation2 + $0x8] sm:$0xff]
    %v100 = vld [vmem:[%s2] sm:$0x1]
    %v102 = vlaneseq
    %v103 = vshrl.u32 %v102, 7
    %v104 = vsub.s32 0, %v103
    %v105 = vrot.slane %v100, %v104
    %v107 = vadd.f32 %v98, %v105
    %v108 = vadd.f32 %v99, %v105
    %v109 = vld [vmem:[%s3] sm:$0xff]
    %v110 = vld [vmem:[%s3 + $0x8] sm:$0xff]
    %v111 = vadd.f32 %v107, %v109
    %v112 = vadd.f32 %v108, %v110
    %113 = vst.msk [vmem:[%s4] sm:$0xff] %vm46, %v111
    %114 = vst.msk [vmem:[%s4 + $0x8] sm:$0xff] %vm46, %v112
  $region25: #{glm_forward.19} parent=0 // pred_fallthru
    _
  // Predicated region
  $region26: #{glm_forward.19} parent=0 // pred_check
    _
  $region27: #{glm_forward.19} parent=0 // pred_check_branch
    %116 = sbr.rel (0) target = $region29
  $region28: #{glm_forward.19} parent=0 // pred_region
    _
  $region29: #{glm_forward.19} parent=0 // pred_fallthru
    _
  // Predicated region
  $region30: #{glm_forward.19} parent=0 // pred_check
    _
  $region31: #{glm_forward.19} parent=0 // pred_check_branch
    %118 = sbr.rel (0) target = $region33
  $region32: #{glm_forward.19} parent=0 // pred_region
    _
  $region33: #{glm_forward.19} parent=0 // pred_fallthru
    _

// kernel: glm_forward.18
$region0: #{glm_forward.18}
  #allocation0 [shape = 'u32[]', space=smem, size = 0x4, offset = 0x4, fixed_abs, tag = 'smem constant byte address 0x4 - core index']
  #allocation1 [shape = 'u32[144,128]{1,0:T(1,128)}', space=vmem, size = 0x12000, scoped, tag = 'internal scratch']
  %s0 = inlined_call_operand.vmem [shape: f32[2,4,8,8], index: 0, kind: input, shape index: {}]
  %s1 = inlined_call_operand.vmem [shape: f32[2,4,8,8], index: 1, kind: input, shape index: {}]
  %s2 = inlined_call_operand.vmem [shape: f32[2,4,8,8], index: 2, kind: input, shape index: {}]
  %s3 = inlined_call_operand.vmem [shape: f32[1,8,8], index: 3, kind: input, shape index: {}]
  %s4 = inlined_call_operand.vmem [shape: f32[2,4,8,8], index: 4, kind: output, shape index: {}]
  %s5 = sld [smem:[#allocation0]]
  $region49: #{glm_forward.18} parent=0
    _
  %s7 = ssub.s32 1, %s5
  %s8 = scalar_select 0, %s7, %s5
  loop: start=0, step=1, limit=10
  $region2: #{glm_forward.18} parent=0 // loop_pre_header
    _
  $region3: #{glm_forward.18} parent=0 // loop_header
    %s10 = sphi 0, %s14
    %p11 = scmp.ge.s32.totalorder %s10, 10
    %s17 = sphi 0, %s29
    %s18 = sphi 0, %s25
    %s19 = sphi 0, %s17
    %s20 = sphi 0, %s18
    %s21 = sphi 0, %s19
    %s22 = sphi 0, %s20
    %s34 = sphi 0, %s36
    %s37 = sphi 0, %s34
    %s38 = sphi 0, %s37
    %s54 = sphi 0, %s38
    %s62 = sphi 0, %s64
    %s65 = sphi 0, %s62
    %s66 = sphi 0, %s65
    %s82 = sphi 0, %s66
    %s90 = sphi 0, %s92
    %s93 = sphi 0, %s90
    %s94 = sphi 0, %s93
    %s110 = sphi 0, %s94
    %s114 = sphi 0, %s114
    %s116 = sphi 0, %s114
    %s117 = sphi 0, %s116
    %s131 = sphi 0, %s117
    %s139 = sphi 0, %s141
    %s142 = sphi 0, %s139
    %s143 = sphi 0, %s142
    %s159 = sphi 0, %s143
  $region4: #{glm_forward.18} parent=0 // loop_header_branch
    %13 = sbr.rel (%p11) target = $region8
  $region5: #{glm_forward.18} parent=0 // loop_body
    %s15 = ssub.s32 %s10, 1
    %s16 = ssub.s32 %s10, 2
    %s23 = sadd.s32 1, %s18
    %p24 = scmp.ge.s32.totalorder %s23, 4
    %s25 = scalar_select %p24, 0, %s23
    %s26 = sadd.s32 1, %s17
    %s27 = scalar_select %p24, %s26, %s17
    %p28 = scmp.ge.s32.totalorder %s27, 2
    %s29 = scalar_select %p28, 0, %s27
    %s30 = ssub.s32 %s17, %s29
    %s31 = ssub.s32 %s18, %s25
    %s32 = sor.u32 %s30, %s31
    %p33 = scmp.eq.s32.totalorder %s32, 0
    %s35 = sadd.s32 %s34, 1
    %s36 = scalar_select %p33, %s34, %s35
    %p39 = pneg %p33
    %p40 = scmp.eq.s32.totalorder %s10, 7
    %p41 = por %p39, %p40
    %p42 = scmp.ne.s32.totalorder %s34, %s37
    %p43 = scmp.eq.s32.totalorder %s10, 0
    %p44 = por %p42, %p43
    %p45 = scmp.ne.s32.totalorder %s34, %s37
    %p46 = scmp.eq.s32.totalorder %s15, 7
    %p47 = por %p45, %p46
    %p48 = scmp.ne.s32.totalorder %s37, %s38
    %p49 = scmp.eq.s32.totalorder %s15, 0
    %p50 = por %p48, %p49
    %p51 = scmp.ne.s32.totalorder %s37, %s38
    %p52 = scmp.eq.s32.totalorder %s16, 7
    %p53 = por %p51, %p52
    %p55 = scmp.ne.s32.totalorder %s38, %s54
    %p56 = scmp.eq.s32.totalorder %s16, 0
    %p57 = por %p55, %p56
    %s58 = ssub.s32 %s17, %s29
    %s59 = ssub.s32 %s18, %s25
    %s60 = sor.u32 %s58, %s59
    %p61 = scmp.eq.s32.totalorder %s60, 0
    %s63 = sadd.s32 %s62, 1
    %s64 = scalar_select %p61, %s62, %s63
    %p67 = pneg %p61
    %p68 = scmp.eq.s32.totalorder %s10, 7
    %p69 = por %p67, %p68
    %p70 = scmp.ne.s32.totalorder %s62, %s65
    %p71 = scmp.eq.s32.totalorder %s10, 0
    %p72 = por %p70, %p71
    %p73 = scmp.ne.s32.totalorder %s62, %s65
    %p74 = scmp.eq.s32.totalorder %s15, 7
    %p75 = por %p73, %p74
    %p76 = scmp.ne.s32.totalorder %s65, %s66
    %p77 = scmp.eq.s32.totalorder %s15, 0
    %p78 = por %p76, %p77
    %p79 = scmp.ne.s32.totalorder %s65, %s66
    %p80 = scmp.eq.s32.totalorder %s16, 7
    %p81 = por %p79, %p80
    %p83 = scmp.ne.s32.totalorder %s66, %s82
    %p84 = scmp.eq.s32.totalorder %s16, 0
    %p85 = por %p83, %p84
    %s86 = ssub.s32 %s17, %s29
    %s87 = ssub.s32 %s18, %s25
    %s88 = sor.u32 %s86, %s87
    %p89 = scmp.eq.s32.totalorder %s88, 0
    %s91 = sadd.s32 %s90, 1
    %s92 = scalar_select %p89, %s90, %s91
    %p95 = pneg %p89
    %p96 = scmp.eq.s32.totalorder %s10, 7
    %p97 = por %p95, %p96
    %p98 = scmp.ne.s32.totalorder %s90, %s93
    %p99 = scmp.eq.s32.totalorder %s10, 0
    %p100 = por %p98, %p99
    %p101 = scmp.ne.s32.totalorder %s90, %s93
    %p102 = scmp.eq.s32.totalorder %s15, 7
    %p103 = por %p101, %p102
    %p104 = scmp.ne.s32.totalorder %s93, %s94
    %p105 = scmp.eq.s32.totalorder %s15, 0
    %p106 = por %p104, %p105
    %p107 = scmp.ne.s32.totalorder %s93, %s94
    %p108 = scmp.eq.s32.totalorder %s16, 7
    %p109 = por %p107, %p108
    %p111 = scmp.ne.s32.totalorder %s94, %s110
    %p112 = scmp.eq.s32.totalorder %s16, 0
    %p113 = por %p111, %p112
    %s115 = sadd.s32 %s114, 1
    %p118 = scmp.eq.s32.totalorder %s10, 7
    %p119 = scmp.ne.s32.totalorder %s114, %s116
    %p120 = scmp.eq.s32.totalorder %s10, 0
    %p121 = por %p119, %p120
    %p122 = scmp.ne.s32.totalorder %s114, %s116
    %p123 = scmp.eq.s32.totalorder %s15, 7
    %p124 = por %p122, %p123
    %p125 = scmp.ne.s32.totalorder %s116, %s117
    %p126 = scmp.eq.s32.totalorder %s15, 0
    %p127 = por %p125, %p126
    %p128 = scmp.ne.s32.totalorder %s116, %s117
    %p129 = scmp.eq.s32.totalorder %s16, 7
    %p130 = por %p128, %p129
    %p132 = scmp.ne.s32.totalorder %s117, %s131
    %p133 = scmp.eq.s32.totalorder %s16, 0
    %p134 = por %p132, %p133
    %s135 = ssub.s32 %s17, %s29
    %s136 = ssub.s32 %s18, %s25
    %s137 = sor.u32 %s135, %s136
    %p138 = scmp.eq.s32.totalorder %s137, 0
    %s140 = sadd.s32 %s139, 1
    %s141 = scalar_select %p138, %s139, %s140
    %p144 = pneg %p138
    %p145 = scmp.eq.s32.totalorder %s10, 7
    %p146 = por %p144, %p145
    %p147 = scmp.ne.s32.totalorder %s139, %s142
    %p148 = scmp.eq.s32.totalorder %s10, 0
    %p149 = por %p147, %p148
    %p150 = scmp.ne.s32.totalorder %s139, %s142
    %p151 = scmp.eq.s32.totalorder %s15, 7
    %p152 = por %p150, %p151
    %p153 = scmp.ne.s32.totalorder %s142, %s143
    %p154 = scmp.eq.s32.totalorder %s15, 0
    %p155 = por %p153, %p154
    %p156 = scmp.ne.s32.totalorder %s142, %s143
    %p157 = scmp.eq.s32.totalorder %s16, 7
    %p158 = por %p156, %p157
    %p160 = scmp.ne.s32.totalorder %s143, %s159
    %p161 = scmp.eq.s32.totalorder %s16, 0
    %p162 = por %p160, %p161
    %p163 = scmp.le.s32.totalorder 1, %s10
    %p164 = scmp.lt.s32.totalorder %s10, 9
    %p165 = pnand %p163, %p164
    %p166 = pneg %p165
    // Predicated region
    $region9: #{glm_forward.18} parent=5 // pred_check
      _
    $region10: #{glm_forward.18} parent=5 // pred_check_branch
      %168 = sbr.rel (%p165) target = $region12
    $region11: #{glm_forward.18} parent=5 // pred_region
      %s169 = ssub.s32 %s10, 1
      // Predicated region
      $region13: #{glm_forward.18} parent=11 // pred_check
        %p170 = pneg %p127
      $region14: #{glm_forward.18} parent=11 // pred_check_branch
        %172 = sbr.rel (%p170) target = $region16
      $region15: #{glm_forward.18} parent=11 // pred_region
        _
      $region16: #{glm_forward.18} parent=11 // pred_fallthru
        _
    $region12: #{glm_forward.18} parent=5 // pred_fallthru
      _
    %p173 = scmp.lt.s32.totalorder %s10, 8
    // Predicated region
    $region17: #{glm_forward.18} parent=5 // pred_check
      %p174 = pneg %p173
    $region18: #{glm_forward.18} parent=5 // pred_check_branch
      %176 = sbr.rel (%p174) target = $region20
    $region19: #{glm_forward.18} parent=5 // pred_region
      // Predicated region
      $region21: #{glm_forward.18} parent=19 // pred_check
        %p177 = pneg %p44
      $region22: #{glm_forward.18} parent=19 // pred_check_branch
        %179 = sbr.rel (%p177) target = $region24
      $region23: #{glm_forward.18} parent=19 // pred_region
        %p180 = scmp.lt.s32.totalorder %s17, 1
        %s181 = scalar_select %p180, %s17, 1
        %p182 = scmp.lt.s32.totalorder %s18, 3
        %s183 = scalar_select %p182, %s18, 3
        %s184 = smul.addr %s181, 4
        %s185 = sadd.s32 %s183, %s184
        %s186 = smul.addr %s185, 8
        %s187 = scalar_lea.vmem %s0, %s186
      $region24: #{glm_forward.18} parent=19 // pred_fallthru
        _
      // Predicated region
      $region25: #{glm_forward.18} parent=19 // pred_check
        %p188 = pneg %p72
      $region26: #{glm_forward.18} parent=19 // pred_check_branch
        %190 = sbr.rel (%p188) target = $region28
      $region27: #{glm_forward.18} parent=19 // pred_region
        %p191 = scmp.lt.s32.totalorder %s17, 1
        %s192 = scalar_select %p191, %s17, 1
        %p193 = scmp.lt.s32.totalorder %s18, 3
        %s194 = scalar_select %p193, %s18, 3
        %s195 = smul.addr %s192, 4
        %s196 = sadd.s32 %s194, %s195
        %s197 = smul.addr %s196, 8
        %s198 = scalar_lea.vmem %s1, %s197
      $region28: #{glm_forward.18} parent=19 // pred_fallthru
        _
      // Predicated region
      $region29: #{glm_forward.18} parent=19 // pred_check
        %p199 = pneg %p100
      $region30: #{glm_forward.18} parent=19 // pred_check_branch
        %201 = sbr.rel (%p199) target = $region32
      $region31: #{glm_forward.18} parent=19 // pred_region
        %p202 = scmp.lt.s32.totalorder %s17, 1
        %s203 = scalar_select %p202, %s17, 1
        %p204 = scmp.lt.s32.totalorder %s18, 3
        %s205 = scalar_select %p204, %s18, 3
        %s206 = smul.addr %s203, 4
        %s207 = sadd.s32 %s205, %s206
        %s208 = smul.addr %s207, 8
        %s209 = scalar_lea.vmem %s2, %s208
      $region32: #{glm_forward.18} parent=19 // pred_fallthru
        _
    $region20: #{glm_forward.18} parent=5 // pred_fallthru
      _
    %p210 = scmp.le.s32.totalorder 1, %s10
    %p211 = scmp.lt.s32.totalorder %s10, 9
    %p212 = pnand %p210, %p211
    %p213 = pneg %p212
    // Predicated region
    $region33: #{glm_forward.18} parent=5 // pred_check
      _
    $region34: #{glm_forward.18} parent=5 // pred_check_branch
      %215 = sbr.rel (%p212) target = $region36
    $region35: #{glm_forward.18} parent=5 // pred_region
      %s216 = ssub.s32 %s10, 1
      %p217 = scmp.lt.s32.totalorder %s19, 1
      %s218 = scalar_select %p217, %s19, 1
      %p219 = scmp.lt.s32.totalorder %s20, 3
      %s220 = scalar_select %p219, %s20, 3
      %s221 = smul.addr %s218, 4
      %s222 = sadd.s32 %s220, %s221
      %s223 = smul.addr %s222, 8
      %s224 = scalar_lea.vmem %s0, %s223
      %p225 = pneg %p50
      %p226 = pneg %p47
      %p227 = scmp.lt.s32.totalorder %s19, 1
      %s228 = scalar_select %p227, %s19, 1
      %p229 = scmp.lt.s32.totalorder %s20, 3
      %s230 = scalar_select %p229, %s20, 3
      %s231 = smul.addr %s228, 4
      %s232 = sadd.s32 %s230, %s231
      %s233 = smul.addr %s232, 8
      %s234 = scalar_lea.vmem %s1, %s233
      %p235 = pneg %p78
      %p236 = pneg %p75
      %p237 = scmp.lt.s32.totalorder %s19, 1
      %s238 = scalar_select %p237, %s19, 1
      %p239 = scmp.lt.s32.totalorder %s20, 3
      %s240 = scalar_select %p239, %s20, 3
      %s241 = smul.addr %s238, 4
      %s242 = sadd.s32 %s240, %s241
      %s243 = smul.addr %s242, 8
      %s244 = scalar_lea.vmem %s2, %s243
      %p245 = pneg %p106
      %p246 = pneg %p103
      %p247 = pneg %p127
      %p248 = pneg %p124
      %p249 = pneg %p155
      %p250 = pneg %p152
      %p251 = scmp.lt.s32.totalorder %s19, 1
      %s252 = scalar_select %p251, %s19, 1
      %p253 = scmp.lt.s32.totalorder %s20, 3
      %s254 = scalar_select %p253, %s20, 3
      %s255 = smul.addr %s252, 4
      %s256 = sadd.s32 %s254, %s255
      %s257 = smul.addr %s256, 8
      %s258 = scalar_lea.vmem %s4, %s257
      %p259 = scmp.lt.s32.totalorder %s19, 1
      %s260 = scalar_select %p259, %s19, 1
      %p261 = scmp.lt.s32.totalorder %s20, 3
      %s262 = scalar_select %p261, %s20, 3
      %s263 = smul.addr %s260, 4
      %s264 = sadd.s32 %s262, %s263
      %s265 = smul.addr %s264, 8
      %s266 = scalar_lea.vmem %s0, %s265
      %p267 = scmp.lt.s32.totalorder %s19, 1
      %s268 = scalar_select %p267, %s19, 1
      %p269 = scmp.lt.s32.totalorder %s20, 3
      %s270 = scalar_select %p269, %s20, 3
      %s271 = smul.addr %s268, 4
      %s272 = sadd.s32 %s270, %s271
      %s273 = smul.addr %s272, 8
      %s274 = scalar_lea.vmem %s1, %s273
      %p275 = scmp.lt.s32.totalorder %s19, 1
      %s276 = scalar_select %p275, %s19, 1
      %p277 = scmp.lt.s32.totalorder %s20, 3
      %s278 = scalar_select %p277, %s20, 3
      %s279 = smul.addr %s276, 4
      %s280 = sadd.s32 %s278, %s279
      %s281 = smul.addr %s280, 8
      %s282 = scalar_lea.vmem %s2, %s281
      %p283 = scmp.lt.s32.totalorder %s19, 1
      %s284 = scalar_select %p283, %s19, 1
      %p285 = scmp.lt.s32.totalorder %s20, 3
      %s286 = scalar_select %p285, %s20, 3
      %s287 = smul.addr %s284, 4
      %s288 = sadd.s32 %s286, %s287
      %s289 = smul.addr %s288, 8
      %s290 = scalar_lea.vmem %s4, %s289
      %v292 = vld [vmem:[%s266] sm:$0xff]
      %v293 = vld [vmem:[%s274] sm:$0xff]
      %v294 = vld [vmem:[%s282] sm:$0xff]
      %v295 = vld [vmem:[%s3] sm:$0xff]
      %v296 = vmul.f32 %v292, 0.35355338
      %v297 = vpack.c.bf16 %v296, %v296
      %v298 = vpack.c.bf16 %v293, %v293
      %vm299 = vcmask 64512
      %v301 = vsel %vm299, %v297, 0
      %v304 = vsel %vm299, %v298, 0
      %306 = vmatprep.subr.bf16.mxu0 0
      %307 = vmatpush1.bf16.xpose.msra.mxu0 %v304
      %308 = vmatprep.subr.bf16.mxu0 0
      %309 = vmatpush1.bf16.xpose.msra.mxu0 0
      %310 = vmatprep.subr.bf16.mxu0 0
      %311 = vmatpush1.bf16.xpose.msra.mxu0 0
      %312 = vmatprep.subr.bf16.mxu0 0
      %313 = vmatpush1.bf16.xpose.msra.mxu0 0
      %314 = vmatprep.subr.bf16.mxu0 0
      %315 = vmatpush1.bf16.xpose.msra.mxu0 0
      %316 = vmatprep.subr.bf16.mxu0 0
      %317 = vmatpush1.bf16.xpose.msra.mxu0 0
      %318 = vmatprep.subr.bf16.mxu0 0
      %319 = vmatpush1.bf16.xpose.msra.mxu0 0
      %320 = vmatprep.subr.bf16.mxu0 0
      %321 = vmatpush1.bf16.xpose.msra.mxu0 0
      %322 = vmatprep.subr.bf16.mxu0 0
      %323 = vmatpush1.bf16.xpose.msra.mxu0 0
      %324 = vmatprep.subr.bf16.mxu0 0
      %325 = vmatpush1.bf16.xpose.msra.mxu0 0
      %326 = vmatprep.subr.bf16.mxu0 0
      %327 = vmatpush1.bf16.xpose.msra.mxu0 0
      %328 = vmatprep.subr.bf16.mxu0 0
      %329 = vmatpush1.bf16.xpose.msra.mxu0 0
      %330 = vmatprep.subr.bf16.mxu0 0
      %331 = vmatpush1.bf16.xpose.msra.mxu0 0
      %332 = vmatprep.subr.bf16.mxu0 0
      %333 = vmatpush1.bf16.xpose.msra.mxu0 0
      %334 = vmatprep.subr.bf16.mxu0 0
      %335 = vmatpush1.bf16.xpose.msra.mxu0 0
      %336 = vmatprep.subr.bf16.mxu0 0
      %337 = vmatpush1.bf16.xpose.msra.mxu0 0
      %338 = vmatprep.mubr.bf16.mxu0 0
      %339 = vmatmul.mubr.bf16.gmra.mrb[0].mxu0 %v301
      %v340 = vpop.f32.mrb[0].mxu0
      %v341 = vadd.f32 0.0, %v340
      %v342 = vpop.f32.mrb[0].mxu0
      %v343 = vpop.f32.mrb[0].mxu0
      %v344 = vpop.f32.mrb[0].mxu0
      %345 = vdwg.mxu0
      %vm346 = vcmp.gt.f32.partialorder %v295, 0.5
      %v347 = vsel %vm346, %v341, -10000.0
      %v348 = vsel %vm299, %v347, -inf
      %349 = vmax.xlane.f32.xlu0 %v348
      %v350 = vpop.xlane.xlu0 %349
      %v351 = vsub.f32 %v347, %v350
      %v352 = vmul.f32 %v351, 1.442695
      %v353 = vpow.pop %v352
      %v354 = vsel %vm299, %v353, 0.0
      %355 = vadd.xlane.f32.xlu0 %v354
      %v356 = vpop.xlane.xlu0 %355
      %v357 = vrcp.pop %v356
      %v358 = vmul.f32 %v353, %v357
      %v359 = vpack.c.bf16 %v358, %v358
      %v360 = vpack.c.bf16 %v294, %v294
      %v362 = vsel %vm299, %v359, 0
      %vm364 = vcmask 1043456
      %v366 = vsel %vm364, %v360, 0
      %368 = vmatprep.subr.bf16.mxu0 0
      %369 = vmatpush1.bf16.msra.mxu0 %v366
      %370 = vmatprep.subr.bf16.mxu0 0
      %371 = vmatpush1.bf16.msra.mxu0 0
      %372 = vmatprep.subr.bf16.mxu0 0
      %373 = vmatpush1.bf16.msra.mxu0 0
      %374 = vmatprep.subr.bf16.mxu0 0
      %375 = vmatpush1.bf16.msra.mxu0 0
      %376 = vmatprep.subr.bf16.mxu0 0
      %377 = vmatpush1.bf16.msra.mxu0 0
      %378 = vmatprep.subr.bf16.mxu0 0
      %379 = vmatpush1.bf16.msra.mxu0 0
      %380 = vmatprep.subr.bf16.mxu0 0
      %381 = vmatpush1.bf16.msra.mxu0 0
      %382 = vmatprep.subr.bf16.mxu0 0
      %383 = vmatpush1.bf16.msra.mxu0 0
      %384 = vmatprep.subr.bf16.mxu0 0
      %385 = vmatpush1.bf16.msra.mxu0 0
      %386 = vmatprep.subr.bf16.mxu0 0
      %387 = vmatpush1.bf16.msra.mxu0 0
      %388 = vmatprep.subr.bf16.mxu0 0
      %389 = vmatpush1.bf16.msra.mxu0 0
      %390 = vmatprep.subr.bf16.mxu0 0
      %391 = vmatpush1.bf16.msra.mxu0 0
      %392 = vmatprep.subr.bf16.mxu0 0
      %393 = vmatpush1.bf16.msra.mxu0 0
      %394 = vmatprep.subr.bf16.mxu0 0
      %395 = vmatpush1.bf16.msra.mxu0 0
      %396 = vmatprep.subr.bf16.mxu0 0
      %397 = vmatpush1.bf16.msra.mxu0 0
      %398 = vmatprep.subr.bf16.mxu0 0
      %399 = vmatpush1.bf16.msra.mxu0 0
      %400 = vmatprep.mubr.bf16.mxu0 0
      %401 = vmatmul.mubr.bf16.gmra.mrb[0].mxu0 %v362
      %v402 = vpop.f32.mrb[0].mxu0
      %v403 = vadd.f32 0.0, %v402
      %v404 = vpop.f32.mrb[0].mxu0
      %v405 = vpop.f32.mrb[0].mxu0
      %v406 = vpop.f32.mrb[0].mxu0
      %407 = vdwg.mxu0
      %408 = vst.msk [vmem:[%s290] sm:$0xff] %vm299, %v403
      %p409 = scmp.lt.s32.totalorder %s19, 1
      %s410 = scalar_select %p409, %s19, 1
      %p411 = scmp.lt.s32.totalorder %s20, 3
      %s412 = scalar_select %p411, %s20, 3
      %s413 = smul.addr %s410, 4
      %s414 = sadd.s32 %s412, %s413
      %s415 = smul.addr %s414, 8
      %s416 = scalar_lea.vmem %s4, %s415
      // Predicated region
      $region37: #{glm_forward.18} parent=35 // pred_check
        %p417 = pneg %p152
      $region38: #{glm_forward.18} parent=35 // pred_check_branch
        %419 = sbr.rel (%p417) target = $region40
      $region39: #{glm_forward.18} parent=35 // pred_region
        _
      $region40: #{glm_forward.18} parent=35 // pred_fallthru
        _
    $region36: #{glm_forward.18} parent=5 // pred_fallthru
      _
    %p420 = scmp.le.s32.totalorder 2, %s10
    // Predicated region
    $region41: #{glm_forward.18} parent=5 // pred_check
      %p421 = pneg %p420
    $region42: #{glm_forward.18} parent=5 // pred_check_branch
      %423 = sbr.rel (%p421) target = $region44
    $region43: #{glm_forward.18} parent=5 // pred_region
      %s424 = ssub.s32 %s10, 2
      // Predicated region
      $region45: #{glm_forward.18} parent=43 // pred_check
        %p425 = pneg %p158
      $region46: #{glm_forward.18} parent=43 // pred_check_branch
        %427 = sbr.rel (%p425) target = $region48
      $region47: #{glm_forward.18} parent=43 // pred_region
        %p428 = scmp.lt.s32.totalorder %s21, 1
        %s429 = scalar_select %p428, %s21, 1
        %p430 = scmp.lt.s32.totalorder %s22, 3
        %s431 = scalar_select %p430, %s22, 3
        %s432 = smul.addr %s429, 4
        %s433 = sadd.s32 %s431, %s432
        %s434 = smul.addr %s433, 8
        %s435 = scalar_lea.vmem %s4, %s434
      $region48: #{glm_forward.18} parent=43 // pred_fallthru
        _
    $region44: #{glm_forward.18} parent=5 // pred_fallthru
      _
  $region6: #{glm_forward.18} parent=0 // loop_footer
    %s14 = sadd.s32 1, %s10
  $region7: #{glm_forward.18} parent=0 // loop_footer_branch
    %9 = sbr.rel target = $region3
  $region8: #{glm_forward.18} parent=0 // loop_exit
    _

// kernel: glm_forward.16
$region0: #{glm_forward.16}
  #allocation0 [shape = 'u32[]', space=smem, size = 0x4, offset = 0x4, fixed_abs, tag = 'smem constant byte address 0x4 - core index']
  #allocation1 [shape = 'u32[144,128]{1,0:T(1,128)}', space=vmem, size = 0x12000, scoped, tag = 'internal scratch']
  %s0 = inlined_call_operand.vmem [shape: f32[16,32], index: 0, kind: input, shape index: {}]
  %s1 = inlined_call_operand.vmem [shape: f32[1,32], index: 1, kind: input, shape index: {}]
  %s2 = inlined_call_operand.vmem [shape: f32[1,32], index: 2, kind: input, shape index: {}]
  %s3 = inlined_call_operand.vmem [shape: f32[16,32], index: 3, kind: output, shape index: {}]
  %s4 = sld [smem:[#allocation0]]
  $region22: #{glm_forward.16} parent=0
    _
  %s6 = ssub.s32 1, %s4
  %s7 = scalar_select 0, %s6, %s4
  // Predicated region
  $region2: #{glm_forward.16} parent=0 // pred_check
    _
  $region3: #{glm_forward.16} parent=0 // pred_check_branch
    %9 = sbr.rel (0) target = $region5
  $region4: #{glm_forward.16} parent=0 // pred_region
    _
  $region5: #{glm_forward.16} parent=0 // pred_fallthru
    _
  // Predicated region
  $region6: #{glm_forward.16} parent=0 // pred_check
    _
  $region7: #{glm_forward.16} parent=0 // pred_check_branch
    %11 = sbr.rel (0) target = $region9
  $region8: #{glm_forward.16} parent=0 // pred_region
    _
  $region9: #{glm_forward.16} parent=0 // pred_fallthru
    _
  // Predicated region
  $region10: #{glm_forward.16} parent=0 // pred_check
    _
  $region11: #{glm_forward.16} parent=0 // pred_check_branch
    %13 = sbr.rel (0) target = $region13
  $region12: #{glm_forward.16} parent=0 // pred_region
    _
  $region13: #{glm_forward.16} parent=0 // pred_fallthru
    _
  %v14 = vld [vmem:[%s0] sm:$0xff]
  %v15 = vld [vmem:[%s0 + $0x8] sm:$0xff]
  %vm16 = vcmask 261120
  %v17 = vsel %vm16, %v14, 0.0
  %18 = vadd.xlane.f32.xlu0 %v17
  %v19 = vpop.xlane.xlu0 %18
  %v20 = vsel %vm16, %v15, 0.0
  %21 = vadd.xlane.f32.xlu0 %v20
  %v22 = vpop.xlane.xlu0 %21
  %v23 = vrcp.pop 32.0
  %v24 = vmul.f32 %v19, %v23
  %v25 = vmul.f32 %v22, %v23
  %v26 = vsub.f32 %v14, %v24
  %v27 = vsub.f32 %v15, %v25
  %v28 = vmul.f32 %v26, %v26
  %v29 = vmul.f32 %v27, %v27
  %v30 = vsel %vm16, %v28, 0.0
  %31 = vadd.xlane.f32.xlu0 %v30
  %v32 = vpop.xlane.xlu0 %31
  %v33 = vsel %vm16, %v29, 0.0
  %34 = vadd.xlane.f32.xlu0 %v33
  %v35 = vpop.xlane.xlu0 %34
  %v36 = vmul.f32 %v32, %v23
  %v37 = vmul.f32 %v35, %v23
  %v38 = vadd.f32 %v36, 1e-05
  %v39 = vadd.f32 %v37, 1e-05
  %v40 = vrsqrt.pop %v38
  %v41 = vrsqrt.pop %v39
  %v42 = vmul.f32 %v26, %v40
  %v43 = vmul.f32 %v27, %v41
  %v44 = vld [vmem:[%s1] sm:$0x1]
  %v46 = vlaneseq
  %v47 = vshrl.u32 %v46, 7
  %v48 = vsub.s32 0, %v47
  %v49 = vrot.slane %v44, %v48
  %v51 = vmul.f32 %v42, %v49
  %v52 = vmul.f32 %v43, %v49
  %v53 = vld [vmem:[%s2] sm:$0x1]
  %v55 = vlaneseq
  %v56 = vshrl.u32 %v55, 7
  %v57 = vsub.s32 0, %v56
  %v58 = vrot.slane %v53, %v57
  %v60 = vadd.f32 %v51, %v58
  %v61 = vadd.f32 %v52, %v58
  %62 = vst.msk [vmem:[%s3] sm:$0xff] %vm16, %v60
  %63 = vst.msk [vmem:[%s3 + $0x8] sm:$0xff] %vm16, %v61
  // Predicated region
  $region14: #{glm_forward.16} parent=0 // pred_check
    _
  $region15: #{glm_forward.16} parent=0 // pred_check_branch
    %65 = sbr.rel (0) target = $region17
  $region16: #{glm_forward.16} parent=0 // pred_region
    _
  $region17: #{glm_forward.16} parent=0 // pred_fallthru
    _
  // Predicated region
  $region18: #{glm_forward.16} parent=0 // pred_check
    _
  $region19: #{glm_forward.16} parent=0 // pred_check_branch
    %67 = sbr.rel (0) target = $region21
  $region20: #{glm_forward.16} parent=0 // pred_region
    _
  $region21: #{glm_forward.16} parent=0 // pred_fallthru
    _

// kernel: glm_forward.17
$region0: #{glm_forward.17}
  #allocation0 [shape = 'u32[]', space=smem, size = 0x4, offset = 0x4, fixed_abs, tag = 'smem constant byte address 0x4 - core index']
  #allocation1 [shape = 'u32[144,128]{1,0:T(1,128)}', space=vmem, size = 0x12000, scoped, tag = 'internal scratch']
  #allocation2 [shape = 'f32[16,96]{1,0:T(8,128)}', space=vmem, size = 0x2000, scoped, tag = 'scratch operand']
  %s0 = inlined_call_operand.vmem [shape: f32[16,32], index: 0, kind: input, shape index: {}]
  %s1 = inlined_call_operand.vmem [shape: bf16[32,96], index: 1, kind: input, shape index: {}]
  %s2 = inlined_call_operand.vmem [shape: f32[1,96], index: 2, kind: input, shape index: {}]
  %s3 = inlined_call_operand.vmem [shape: f32[16,96], index: 3, kind: output, shape index: {}]
  %s4 = sld [smem:[#allocation0]]
  $region30: #{glm_forward.17} parent=0
    _
  %s6 = ssub.s32 1, %s4
  %s7 = scalar_select 0, %s6, %s4
  // Predicated region
  $region2: #{glm_forward.17} parent=0 // pred_check
    _
  $region3: #{glm_forward.17} parent=0 // pred_check_branch
    %9 = sbr.rel (0) target = $region5
  $region4: #{glm_forward.17} parent=0 // pred_region
    _
  $region5: #{glm_forward.17} parent=0 // pred_fallthru
    _
  // Predicated region
  $region6: #{glm_forward.17} parent=0 // pred_check
    _
  $region7: #{glm_forward.17} parent=0 // pred_check_branch
    %11 = sbr.rel (0) target = $region9
  $region8: #{glm_forward.17} parent=0 // pred_region
    _
  $region9: #{glm_forward.17} parent=0 // pred_fallthru
    _
  // Predicated region
  $region10: #{glm_forward.17} parent=0 // pred_check
    _
  $region11: #{glm_forward.17} parent=0 // pred_check_branch
    %13 = sbr.rel (0) target = $region13
  $region12: #{glm_forward.17} parent=0 // pred_region
    _
  $region13: #{glm_forward.17} parent=0 // pred_fallthru
    _
  %p15 = scmp.eq.s32.totalorder 0, 0
  // Predicated region
  $region14: #{glm_forward.17} parent=0 // pred_check
    %p16 = pneg %p15
  $region15: #{glm_forward.17} parent=0 // pred_check_branch
    %18 = sbr.rel (%p16) target = $region17
  $region16: #{glm_forward.17} parent=0 // pred_region
    %vm19 = vcmask 785408
    %20 = vst.msk [vmem:[#allocation2] sm:$0xff] %vm19, 0.0
    %21 = vst.msk [vmem:[#allocation2 + $0x8] sm:$0xff] %vm19, 0.0
  $region17: #{glm_forward.17} parent=0 // pred_fallthru
    _
  %v22 = vld [vmem:[%s0] sm:$0xff]
  %v23 = vld [vmem:[%s0 + $0x8] sm:$0xff]
  %v24 = vpack.c.bf16 %v23, %v22
  %v25 = vld [vmem:[%s1] sm:$0xf]
  %v26 = vld [vmem:[%s1 + $0x4] sm:$0xf]
  %v27 = vld [vmem:[%s1 + $0x8] sm:$0xf]
  %v28 = vld [vmem:[%s1 + $0xc] sm:$0xf]
  %v29 = vld [vmem:[#allocation2] sm:$0xff]
  %v30 = vld [vmem:[#allocation2 + $0x8] sm:$0xff]
  %v35 = vunpack.c.l.b16 %v25
  %v36 = vunpack.c.l.b16 %v26
  %v37 = vunpack.c.l.b16 %v27
  %v38 = vunpack.c.l.b16 %v28
  %v39 = vpack.c.b16 %v36, %v35
  %v40 = vpack.c.b16 %v38, %v37
  %vm43 = vcmask 261120
  %v45 = vsel %vm43, %v24, 0
  %47 = vmatprep.subr.bf16.mxu0 0
  %48 = vmatpush1.bf16.msra.mxu0 %v39
  %49 = vmatprep.subr.bf16.mxu0 0
  %50 = vmatpush1.bf16.msra.mxu0 %v40
  %51 = vmatprep.subr.bf16.mxu0 0
  %52 = vmatpush1.bf16.msra.mxu0 0
  %53 = vmatprep.subr.bf16.mxu0 0
  %54 = vmatpush1.bf16.msra.mxu0 0
  %55 = vmatprep.subr.bf16.mxu0 0
  %56 = vmatpush1.bf16.msra.mxu0 0
  %57 = vmatprep.subr.bf16.mxu0 0
  %58 = vmatpush1.bf16.msra.mxu0 0
  %59 = vmatprep.subr.bf16.mxu0 0
  %60 = vmatpush1.bf16.msra.mxu0 0
  %61 = vmatprep.subr.bf16.mxu0 0
  %62 = vmatpush1.bf16.msra.mxu0 0
  %63 = vmatprep.subr.bf16.mxu0 0
  %64 = vmatpush1.bf16.msra.mxu0 0
  %65 = vmatprep.subr.bf16.mxu0 0
  %66 = vmatpush1.bf16.msra.mxu0 0
  %67 = vmatprep.subr.bf16.mxu0 0
  %68 = vmatpush1.bf16.msra.mxu0 0
  %69 = vmatprep.subr.bf16.mxu0 0
  %70 = vmatpush1.bf16.msra.mxu0 0
  %71 = vmatprep.subr.bf16.mxu0 0
  %72 = vmatpush1.bf16.msra.mxu0 0
  %73 = vmatprep.subr.bf16.mxu0 0
  %74 = vmatpush1.bf16.msra.mxu0 0
  %75 = vmatprep.subr.bf16.mxu0 0
  %76 = vmatpush1.bf16.msra.mxu0 0
  %77 = vmatprep.subr.bf16.mxu0 0
  %78 = vmatpush1.bf16.msra.mxu0 0
  %79 = vmatprep.mubr.bf16.mxu0 0
  %80 = vmatmul.mubr.bf16.gmra.mrb[0].mxu0 %v45
  %v81 = vpop.f32.mrb[0].mxu0
  %v82 = vadd.f32 0.0, %v81
  %v83 = vpop.f32.mrb[0].mxu0
  %v84 = vpop.f32.mrb[0].mxu0
  %v85 = vadd.f32 0.0, %v84
  %v86 = vpop.f32.mrb[0].mxu0
  %87 = vdwg.mxu0
  %v88 = vadd.f32 %v29, %v82
  %v89 = vadd.f32 %v30, %v85
  %vm90 = vcmask 785408
  %91 = vst.msk [vmem:[#allocation2] sm:$0xff] %vm90, %v88
  %92 = vst.msk [vmem:[#allocation2 + $0x8] sm:$0xff] %vm90, %v89
  // Predicated region
  $region18: #{glm_forward.17} parent=0 // pred_check
    %p93 = pneg %p15
  $region19: #{glm_forward.17} parent=0 // pred_check_branch
    %95 = sbr.rel (%p93) target = $region21
  $region20: #{glm_forward.17} parent=0 // pred_region
    %v96 = vld [vmem:[#allocation2] sm:$0xff]
    %v97 = vld [vmem:[#allocation2 + $0x8] sm:$0xff]
    %v98 = vld [vmem:[%s2] sm:$0x1]
    %v100 = vlaneseq
    %v101 = vshrl.u32 %v100, 7
    %v102 = vsub.s32 0, %v101
    %v103 = vrot.slane %v98, %v102
    %v105 = vadd.f32 %v96, %v103
    %v106 = vadd.f32 %v97, %v103
    %107 = vst.msk [vmem:[%s3] sm:$0xff] %vm90, %v105
    %108 = vst.msk [vmem:[%s3 + $0x8] sm:$0xff] %vm90, %v106
  $region21: #{glm_forward.17} parent=0 // pred_fallthru
    _
  // Predicated region
  $region22: #{glm_forward.17} parent=0 // pred_check
    _
  $region23: #{glm_forward.17} parent=0 // pred_check_branch
    %110 = sbr.rel (0) target = $region25
  $region24: #{glm_forward.17} parent=0 // pred_region
    _
  $region25: #{glm_forward.17} parent=0 // pred_fallthru
    _
  // Predicated region
  $region26: #{glm_forward.17} parent=0 // pred_check
    _
  $region27: #{glm_forward.17} parent=0 // pred_check_branch
    %112 = sbr.rel (0) target = $region29
  $region28: #{glm_forward.17} parent=0 // pred_region
    _
  $region29: #{glm_forward.17} parent=0 // pred_fallthru
    _

// kernel: glm_forward.31
$region0: #{glm_forward.31}
  #allocation0 [shape = 'u32[]', space=smem, size = 0x4, offset = 0x4, fixed_abs, tag = 'smem constant byte address 0x4 - core index']
  #allocation1 [shape = 'u32[144,128]{1,0:T(1,128)}', space=vmem, size = 0x12000, scoped, tag = 'internal scratch']
  #allocation2 [shape = 'f32[16,128]{1,0:T(8,128)}', space=vmem, size = 0x2000, scoped, tag = 'scratch operand']
  %s0 = inlined_call_operand.vmem [shape: f32[16,32], index: 0, kind: input, shape index: {}]
  %s1 = inlined_call_operand.vmem [shape: f32[128,32], index: 1, kind: input, shape index: {}]
  %s2 = inlined_call_operand.hbm [shape: f32[16,128], index: 2, kind: output, shape index: {}]
  %s3 = sld [smem:[#allocation0]]
  $region26: #{glm_forward.31} parent=0
    _
  %s5 = ssub.s32 1, %s3
  %s6 = scalar_select 0, %s5, %s3
  $region1: #{glm_forward.31} parent=0
    #allocation3 [shape = 'u8[8192]{0}', space=vmem, size = 0x2000, scoped, tag = 'output window, operand 0, single buffered']
    #allocation4 [shape = 's32[1]{0}', space=sflag, size = 0x4, scoped, tag = 'scoped memory for glm_forward.31']
    %7 = vsyncpa [#allocation4], 0
    // Predicated region
    $region2: #{glm_forward.31} parent=1 // pred_check
      _
    $region3: #{glm_forward.31} parent=1 // pred_check_branch
      %9 = sbr.rel (0) target = $region5
    $region4: #{glm_forward.31} parent=1 // pred_region
      _
    $region5: #{glm_forward.31} parent=1 // pred_fallthru
      _
    // Predicated region
    $region6: #{glm_forward.31} parent=1 // pred_check
      _
    $region7: #{glm_forward.31} parent=1 // pred_check_branch
      %11 = sbr.rel (0) target = $region9
    $region8: #{glm_forward.31} parent=1 // pred_region
      _
    $region9: #{glm_forward.31} parent=1 // pred_fallthru
      _
    %p13 = scmp.eq.s32.totalorder 0, 0
    // Predicated region
    $region10: #{glm_forward.31} parent=1 // pred_check
      %p14 = pneg %p13
    $region11: #{glm_forward.31} parent=1 // pred_check_branch
      %16 = sbr.rel (%p14) target = $region13
    $region12: #{glm_forward.31} parent=1 // pred_region
      %17 = vst [vmem:[#allocation2] sm:$0xff] 0.0
      %18 = vst [vmem:[#allocation2 + $0x8] sm:$0xff] 0.0
    $region13: #{glm_forward.31} parent=1 // pred_fallthru
      _
    %v19 = vld [vmem:[%s0] sm:$0xff]
    %v20 = vld [vmem:[%s0 + $0x8] sm:$0xff]
    %v21 = vpack.c.bf16 %v20, %v19
    %v22 = vld [vmem:[%s1] sm:$0xff]
    %v23 = vld [vmem:[%s1 + $0x8] sm:$0xff]
    %v24 = vld [vmem:[%s1 + $0x10] sm:$0xff]
    %v25 = vld [vmem:[%s1 + $0x18] sm:$0xff]
    %v26 = vld [vmem:[%s1 + $0x20] sm:$0xff]
    %v27 = vld [vmem:[%s1 + $0x28] sm:$0xff]
    %v28 = vld [vmem:[%s1 + $0x30] sm:$0xff]
    %v29 = vld [vmem:[%s1 + $0x38] sm:$0xff]
    %v30 = vld [vmem:[%s1 + $0x40] sm:$0xff]
    %v31 = vld [vmem:[%s1 + $0x48] sm:$0xff]
    %v32 = vld [vmem:[%s1 + $0x50] sm:$0xff]
    %v33 = vld [vmem:[%s1 + $0x58] sm:$0xff]
    %v34 = vld [vmem:[%s1 + $0x60] sm:$0xff]
    %v35 = vld [vmem:[%s1 + $0x68] sm:$0xff]
    %v36 = vld [vmem:[%s1 + $0x70] sm:$0xff]
    %v37 = vld [vmem:[%s1 + $0x78] sm:$0xff]
    %v38 = vpack.c.bf16 %v23, %v22
    %v39 = vpack.c.bf16 %v25, %v24
    %v40 = vpack.c.bf16 %v27, %v26
    %v41 = vpack.c.bf16 %v29, %v28
    %v42 = vpack.c.bf16 %v31, %v30
    %v43 = vpack.c.bf16 %v33, %v32
    %v44 = vpack.c.bf16 %v35, %v34
    %v45 = vpack.c.bf16 %v37, %v36
    %v46 = vld [vmem:[#allocation2] sm:$0xff]
    %v47 = vld [vmem:[#allocation2 + $0x8] sm:$0xff]
    %vm48 = vcmask 261120
    %v50 = vsel %vm48, %v21, 0
    %v53 = vsel %vm48, %v38, 0
    %v56 = vsel %vm48, %v39, 0
    %v59 = vsel %vm48, %v40, 0
    %v62 = vsel %vm48, %v41, 0
    %v65 = vsel %vm48, %v42, 0
    %v68 = vsel %vm48, %v43, 0
    %v71 = vsel %vm48, %v44, 0
    %v74 = vsel %vm48, %v45, 0
    %76 = vmatprep.subr.bf16.mxu0 0
    %77 = vmatpush1.bf16.xpose.msra.mxu0 %v53
    %78 = vmatprep.subr.bf16.mxu0 0
    %79 = vmatpush1.bf16.xpose.msra.mxu0 %v56
    %80 = vmatprep.subr.bf16.mxu0 0
    %81 = vmatpush1.bf16.xpose.msra.mxu0 %v59
    %82 = vmatprep.subr.bf16.mxu0 0
    %83 = vmatpush1.bf16.xpose.msra.mxu0 %v62
    %84 = vmatprep.subr.bf16.mxu0 0
    %85 = vmatpush1.bf16.xpose.msra.mxu0 %v65
    %86 = vmatprep.subr.bf16.mxu0 0
    %87 = vmatpush1.bf16.xpose.msra.mxu0 %v68
    %88 = vmatprep.subr.bf16.mxu0 0
    %89 = vmatpush1.bf16.xpose.msra.mxu0 %v71
    %90 = vmatprep.subr.bf16.mxu0 0
    %91 = vmatpush1.bf16.xpose.msra.mxu0 %v74
    %92 = vmatprep.subr.bf16.mxu0 0
    %93 = vmatpush1.bf16.xpose.msra.mxu0 0
    %94 = vmatprep.subr.bf16.mxu0 0
    %95 = vmatpush1.bf16.xpose.msra.mxu0 0
    %96 = vmatprep.subr.bf16.mxu0 0
    %97 = vmatpush1.bf16.xpose.msra.mxu0 0
    %98 = vmatprep.subr.bf16.mxu0 0
    %99 = vmatpush1.bf16.xpose.msra.mxu0 0
    %100 = vmatprep.subr.bf16.mxu0 0
    %101 = vmatpush1.bf16.xpose.msra.mxu0 0
    %102 = vmatprep.subr.bf16.mxu0 0
    %103 = vmatpush1.bf16.xpose.msra.mxu0 0
    %104 = vmatprep.subr.bf16.mxu0 0
    %105 = vmatpush1.bf16.xpose.msra.mxu0 0
    %106 = vmatprep.subr.bf16.mxu0 0
    %107 = vmatpush1.bf16.xpose.msra.mxu0 0
    %108 = vmatprep.mubr.bf16.mxu0 0
    %109 = vmatmul.mubr.bf16.gmra.mrb[0].mxu0 %v50
    %v110 = vpop.f32.mrb[0].mxu0
    %v111 = vadd.f32 0.0, %v110
    %v112 = vpop.f32.mrb[0].mxu0
    %v113 = vpop.f32.mrb[0].mxu0
    %v114 = vadd.f32 0.0, %v113
    %v115 = vpop.f32.mrb[0].mxu0
    %116 = vdwg.mxu0
    %v117 = vadd.f32 %v46, %v111
    %v118 = vadd.f32 %v47, %v114
    %119 = vst [vmem:[#allocation2] sm:$0xff] %v117
    %120 = vst [vmem:[#allocation2 + $0x8] sm:$0xff] %v118
    // Predicated region
    $region14: #{glm_forward.31} parent=1 // pred_check
      %p121 = pneg %p13
    $region15: #{glm_forward.31} parent=1 // pred_check_branch
      %123 = sbr.rel (%p121) target = $region17
    $region16: #{glm_forward.31} parent=1 // pred_region
      %v124 = vld [vmem:[#allocation2] sm:$0xff]
      %v125 = vld [vmem:[#allocation2 + $0x8] sm:$0xff]
      %126 = vst [vmem:[#allocation3] sm:$0xff] %v124
      %127 = vst [vmem:[#allocation3 + $0x8] sm:$0xff] %v125
    $region17: #{glm_forward.31} parent=1 // pred_fallthru
      _
    // Predicated region
    $region18: #{glm_forward.31} parent=1 // pred_check
      _
    $region19: #{glm_forward.31} parent=1 // pred_check_branch
      %129 = sbr.rel (0) target = $region21
    $region20: #{glm_forward.31} parent=1 // pred_region
      %s131 = ssub.s32 256, 256
      %132 = vsyncadd [#allocation4], %s131
      %s133 = sshll.u32 [#allocation3], 4
      %s134 = int_to_ptr.vmem [resolvable:$true] %s133
      %139 = dma.vmem_to_hbm [thread:$0]  %s134, 256, %s2, [#allocation4], 128, 128, 8
    $region21: #{glm_forward.31} parent=1 // pred_fallthru
      _
    // Predicated region
    $region22: #{glm_forward.31} parent=1 // pred_check
      _
    $region23: #{glm_forward.31} parent=1 // pred_check_branch
      %141 = sbr.rel (0) target = $region25
    $region24: #{glm_forward.31} parent=1 // pred_region
      %142 = dma.done [#allocation4], 256
    $region25: #{glm_forward.31} parent=1 // pred_fallthru
      _
    %143 = vsyncpa [#allocation4], 1

// kernel: glm_forward.21
$region0: #{glm_forward.21}
  #allocation0 [shape = 'u32[]', space=smem, size = 0x4, offset = 0x4, fixed_abs, tag = 'smem constant byte address 0x4 - core index']
  #allocation1 [shape = 'u32[144,128]{1,0:T(1,128)}', space=vmem, size = 0x12000, scoped, tag = 'internal scratch']
  #allocation2 [shape = 'f32[16,128]{1,0:T(8,128)}', space=vmem, size = 0x2000, scoped, tag = 'scratch operand']
  %s0 = inlined_call_operand.vmem [shape: f32[16,32], index: 0, kind: input, shape index: {}]
  %s1 = inlined_call_operand.vmem [shape: bf16[32,128], index: 1, kind: input, shape index: {}]
  %s2 = inlined_call_operand.vmem [shape: f32[1,128], index: 2, kind: input, shape index: {}]
  %s3 = inlined_call_operand.vmem [shape: f32[16,128], index: 3, kind: output, shape index: {}]
  %s4 = sld [smem:[#allocation0]]
  $region30: #{glm_forward.21} parent=0
    _
  %s6 = ssub.s32 1, %s4
  %s7 = scalar_select 0, %s6, %s4
  // Predicated region
  $region2: #{glm_forward.21} parent=0 // pred_check
    _
  $region3: #{glm_forward.21} parent=0 // pred_check_branch
    %9 = sbr.rel (0) target = $region5
  $region4: #{glm_forward.21} parent=0 // pred_region
    _
  $region5: #{glm_forward.21} parent=0 // pred_fallthru
    _
  // Predicated region
  $region6: #{glm_forward.21} parent=0 // pred_check
    _
  $region7: #{glm_forward.21} parent=0 // pred_check_branch
    %11 = sbr.rel (0) target = $region9
  $region8: #{glm_forward.21} parent=0 // pred_region
    _
  $region9: #{glm_forward.21} parent=0 // pred_fallthru
    _
  // Predicated region
  $region10: #{glm_forward.21} parent=0 // pred_check
    _
  $region11: #{glm_forward.21} parent=0 // pred_check_branch
    %13 = sbr.rel (0) target = $region13
  $region12: #{glm_forward.21} parent=0 // pred_region
    _
  $region13: #{glm_forward.21} parent=0 // pred_fallthru
    _
  %p15 = scmp.eq.s32.totalorder 0, 0
  // Predicated region
  $region14: #{glm_forward.21} parent=0 // pred_check
    %p16 = pneg %p15
  $region15: #{glm_forward.21} parent=0 // pred_check_branch
    %18 = sbr.rel (%p16) target = $region17
  $region16: #{glm_forward.21} parent=0 // pred_region
    %19 = vst [vmem:[#allocation2] sm:$0xff] 0.0
    %20 = vst [vmem:[#allocation2 + $0x8] sm:$0xff] 0.0
  $region17: #{glm_forward.21} parent=0 // pred_fallthru
    _
  %v21 = vld [vmem:[%s0] sm:$0xff]
  %v22 = vld [vmem:[%s0 + $0x8] sm:$0xff]
  %v23 = vpack.c.bf16 %v22, %v21
  %v24 = vld [vmem:[%s1] sm:$0xf]
  %v25 = vld [vmem:[%s1 + $0x4] sm:$0xf]
  %v26 = vld [vmem:[%s1 + $0x8] sm:$0xf]
  %v27 = vld [vmem:[%s1 + $0xc] sm:$0xf]
  %v28 = vld [vmem:[#allocation2] sm:$0xff]
  %v29 = vld [vmem:[#allocation2 + $0x8] sm:$0xff]
  %v34 = vunpack.c.l.b16 %v24
  %v35 = vunpack.c.l.b16 %v25
  %v36 = vunpack.c.l.b16 %v26
  %v37 = vunpack.c.l.b16 %v27
  %v38 = vpack.c.b16 %v35, %v34
  %v39 = vpack.c.b16 %v37, %v36
  %vm42 = vcmask 261120
  %v44 = vsel %vm42, %v23, 0
  %46 = vmatprep.subr.bf16.mxu0 0
  %47 = vmatpush1.bf16.msra.mxu0 %v38
  %48 = vmatprep.subr.bf16.mxu0 0
  %49 = vmatpush1.bf16.msra.mxu0 %v39
  %50 = vmatprep.subr.bf16.mxu0 0
  %51 = vmatpush1.bf16.msra.mxu0 0
  %52 = vmatprep.subr.bf16.mxu0 0
  %53 = vmatpush1.bf16.msra.mxu0 0
  %54 = vmatprep.subr.bf16.mxu0 0
  %55 = vmatpush1.bf16.msra.mxu0 0
  %56 = vmatprep.subr.bf16.mxu0 0
  %57 = vmatpush1.bf16.msra.mxu0 0
  %58 = vmatprep.subr.bf16.mxu0 0
  %59 = vmatpush1.bf16.msra.mxu0 0
  %60 = vmatprep.subr.bf16.mxu0 0
  %61 = vmatpush1.bf16.msra.mxu0 0
  %62 = vmatprep.subr.bf16.mxu0 0
  %63 = vmatpush1.bf16.msra.mxu0 0
  %64 = vmatprep.subr.bf16.mxu0 0
  %65 = vmatpush1.bf16.msra.mxu0 0
  %66 = vmatprep.subr.bf16.mxu0 0
  %67 = vmatpush1.bf16.msra.mxu0 0
  %68 = vmatprep.subr.bf16.mxu0 0
  %69 = vmatpush1.bf16.msra.mxu0 0
  %70 = vmatprep.subr.bf16.mxu0 0
  %71 = vmatpush1.bf16.msra.mxu0 0
  %72 = vmatprep.subr.bf16.mxu0 0
  %73 = vmatpush1.bf16.msra.mxu0 0
  %74 = vmatprep.subr.bf16.mxu0 0
  %75 = vmatpush1.bf16.msra.mxu0 0
  %76 = vmatprep.subr.bf16.mxu0 0
  %77 = vmatpush1.bf16.msra.mxu0 0
  %78 = vmatprep.mubr.bf16.mxu0 0
  %79 = vmatmul.mubr.bf16.gmra.mrb[0].mxu0 %v44
  %v80 = vpop.f32.mrb[0].mxu0
  %v81 = vadd.f32 0.0, %v80
  %v82 = vpop.f32.mrb[0].mxu0
  %v83 = vpop.f32.mrb[0].mxu0
  %v84 = vadd.f32 0.0, %v83
  %v85 = vpop.f32.mrb[0].mxu0
  %86 = vdwg.mxu0
  %v87 = vadd.f32 %v28, %v81
  %v88 = vadd.f32 %v29, %v84
  %89 = vst [vmem:[#allocation2] sm:$0xff] %v87
  %90 = vst [vmem:[#allocation2 + $0x8] sm:$0xff] %v88
  // Predicated region
  $region18: #{glm_forward.21} parent=0 // pred_check
    %p91 = pneg %p15
  $region19: #{glm_forward.21} parent=0 // pred_check_branch
    %93 = sbr.rel (%p91) target = $region21
  $region20: #{glm_forward.21} parent=0 // pred_region
    %v94 = vld [vmem:[#allocation2] sm:$0xff]
    %v95 = vld [vmem:[#allocation2 + $0x8] sm:$0xff]
    %v96 = vld [vmem:[%s2] sm:$0x1]
    %v98 = vlaneseq
    %v99 = vshrl.u32 %v98, 7
    %v100 = vsub.s32 0, %v99
    %v101 = vrot.slane %v96, %v100
    %v103 = vadd.f32 %v94, %v101
    %v104 = vadd.f32 %v95, %v101
    %v105 = vmul.f32 %v103, 0.5
    %v106 = vmul.f32 %v104, 0.5
    %v107 = vmul.f32 %v103, 0.7978846
    %v108 = vmul.f32 %v104, 0.7978846
    %v109 = vmul.f32 %v103, 0.044715
    %v110 = vmul.f32 %v104, 0.044715
    %v111 = vmul.f32 %v109, %v103
    %v112 = vmul.f32 %v110, %v104
    %v113 = vadd.f32 %v111, 1.0
    %v114 = vadd.f32 %v112, 1.0
    %v115 = vmul.f32 %v107, %v113
    %v116 = vmul.f32 %v108, %v114
    %v117 = vtanh.pop %v115
    %v118 = vtanh.pop %v116
    %v119 = vadd.f32 %v117, 1.0
    %v120 = vadd.f32 %v118, 1.0
    %v121 = vmul.f32 %v105, %v119
    %v122 = vmul.f32 %v106, %v120
    %123 = vst [vmem:[%s3] sm:$0xff] %v121
    %124 = vst [vmem:[%s3 + $0x8] sm:$0xff] %v122
  $region21: #{glm_forward.21} parent=0 // pred_fallthru
    _
  // Predicated region
  $region22: #{glm_forward.21} parent=0 // pred_check
    _
  $region23: #{glm_forward.21} parent=0 // pred_check_branch
    %126 = sbr.rel (0) target = $region25
  $region24: #{glm_forward.21} parent=0 // pred_region
    _
  $region25: #{glm_forward.21} parent=0 // pred_fallthru
    _
  // Predicated region
  $region26: #{glm_forward.21} parent=0 // pred_check
    _
  $region27: #{glm_forward.21} parent=0 // pred_check_branch
    %128 = sbr.rel (0) target = $region29
  $region28: #{glm_forward.21} parent=0 // pred_region
    _
  $region29: #{glm_forward.21} parent=0 // pred_fallthru
    _

// kernel: glm_forward.22
$region0: #{glm_forward.22}
  #allocation0 [shape = 'u32[]', space=smem, size = 0x4, offset = 0x4, fixed_abs, tag = 'smem constant byte address 0x4 - core index']
  #allocation1 [shape = 'u32[144,128]{1,0:T(1,128)}', space=vmem, size = 0x12000, scoped, tag = 'internal scratch']
  #allocation2 [shape = 'f32[16,32]{1,0:T(8,128)}', space=vmem, size = 0x2000, scoped, tag = 'scratch operand']
  %s0 = inlined_call_operand.vmem [shape: f32[16,128], index: 0, kind: input, shape index: {}]
  %s1 = inlined_call_operand.vmem [shape: bf16[128,32], index: 1, kind: input, shape index: {}]
  %s2 = inlined_call_operand.vmem [shape: f32[1,32], index: 2, kind: input, shape index: {}]
  %s3 = inlined_call_operand.vmem [shape: f32[16,32], index: 3, kind: input, shape index: {}]
  %s4 = inlined_call_operand.vmem [shape: f32[16,32], index: 4, kind: output, shape index: {}]
  %s5 = sld [smem:[#allocation0]]
  $region34: #{glm_forward.22} parent=0
    _
  %s7 = ssub.s32 1, %s5
  %s8 = scalar_select 0, %s7, %s5
  // Predicated region
  $region2: #{glm_forward.22} parent=0 // pred_check
    _
  $region3: #{glm_forward.22} parent=0 // pred_check_branch
    %10 = sbr.rel (0) target = $region5
  $region4: #{glm_forward.22} parent=0 // pred_region
    _
  $region5: #{glm_forward.22} parent=0 // pred_fallthru
    _
  // Predicated region
  $region6: #{glm_forward.22} parent=0 // pred_check
    _
  $region7: #{glm_forward.22} parent=0 // pred_check_branch
    %12 = sbr.rel (0) target = $region9
  $region8: #{glm_forward.22} parent=0 // pred_region
    _
  $region9: #{glm_forward.22} parent=0 // pred_fallthru
    _
  // Predicated region
  $region10: #{glm_forward.22} parent=0 // pred_check
    _
  $region11: #{glm_forward.22} parent=0 // pred_check_branch
    %14 = sbr.rel (0) target = $region13
  $region12: #{glm_forward.22} parent=0 // pred_region
    _
  $region13: #{glm_forward.22} parent=0 // pred_fallthru
    _
  // Predicated region
  $region14: #{glm_forward.22} parent=0 // pred_check
    _
  $region15: #{glm_forward.22} parent=0 // pred_check_branch
    %16 = sbr.rel (0) target = $region17
  $region16: #{glm_forward.22} parent=0 // pred_region
    _
  $region17: #{glm_forward.22} parent=0 // pred_fallthru
    _
  %p18 = scmp.eq.s32.totalorder 0, 0
  // Predicated region
  $region18: #{glm_forward.22} parent=0 // pred_check
    %p19 = pneg %p18
  $region19: #{glm_forward.22} parent=0 // pred_check_branch
    %21 = sbr.rel (%p19) target = $region21
  $region20: #{glm_forward.22} parent=0 // pred_region
    %vm22 = vcmask 261120
    %23 = vst.msk [vmem:[#allocation2] sm:$0xff] %vm22, 0.0
    %24 = vst.msk [vmem:[#allocation2 + $0x8] sm:$0xff] %vm22, 0.0
  $region21: #{glm_forward.22} parent=0 // pred_fallthru
    _
  %v25 = vld [vmem:[%s0] sm:$0xff]
  %v26 = vld [vmem:[%s0 + $0x8] sm:$0xff]
  %v27 = vpack.c.bf16 %v26, %v25
  %v28 = vld [vmem:[%s1] sm:$0xf]
  %v29 = vld [vmem:[%s1 + $0x4] sm:$0xf]
  %v30 = vld [vmem:[%s1 + $0x8] sm:$0xf]
  %v31 = vld [vmem:[%s1 + $0xc] sm:$0xf]
  %v32 = vld [vmem:[%s1 + $0x10] sm:$0xf]
  %v33 = vld [vmem:[%s1 + $0x14] sm:$0xf]
  %v34 = vld [vmem:[%s1 + $0x18] sm:$0xf]
  %v35 = vld [vmem:[%s1 + $0x1c] sm:$0xf]
  %v36 = vld [vmem:[%s1 + $0x20] sm:$0xf]
  %v37 = vld [vmem:[%s1 + $0x24] sm:$0xf]
  %v38 = vld [vmem:[%s1 + $0x28] sm:$0xf]
  %v39 = vld [vmem:[%s1 + $0x2c] sm:$0xf]
  %v40 = vld [vmem:[%s1 + $0x30] sm:$0xf]
  %v41 = vld [vmem:[%s1 + $0x34] sm:$0xf]
  %v42 = vld [vmem:[%s1 + $0x38] sm:$0xf]
  %v43 = vld [vmem:[%s1 + $0x3c] sm:$0xf]
  %v44 = vld [vmem:[#allocation2] sm:$0xff]
  %v45 = vld [vmem:[#allocation2 + $0x8] sm:$0xff]
  %v62 = vunpack.c.l.b16 %v28
  %v63 = vunpack.c.l.b16 %v29
  %v64 = vunpack.c.l.b16 %v30
  %v65 = vunpack.c.l.b16 %v31
  %v66 = vunpack.c.l.b16 %v32
  %v67 = vunpack.c.l.b16 %v33
  %v68 = vunpack.c.l.b16 %v34
  %v69 = vunpack.c.l.b16 %v35
  %v70 = vunpack.c.l.b16 %v36
  %v71 = vunpack.c.l.b16 %v37
  %v72 = vunpack.c.l.b16 %v38
  %v73 = vunpack.c.l.b16 %v39
  %v74 = vunpack.c.l.b16 %v40
  %v75 = vunpack.c.l.b16 %v41
  %v76 = vunpack.c.l.b16 %v42
  %v77 = vunpack.c.l.b16 %v43
  %v78 = vpack.c.b16 %v63, %v62
  %v79 = vpack.c.b16 %v65, %v64
  %v80 = vpack.c.b16 %v67, %v66
  %v81 = vpack.c.b16 %v69, %v68
  %v82 = vpack.c.b16 %v71, %v70
  %v83 = vpack.c.b16 %v73, %v72
  %v84 = vpack.c.b16 %v75, %v74
  %v85 = vpack.c.b16 %v77, %v76
  %94 = vmatprep.subr.bf16.mxu0 0
  %95 = vmatpush1.bf16.msra.mxu0 %v78
  %96 = vmatprep.subr.bf16.mxu0 0
  %97 = vmatpush1.bf16.msra.mxu0 %v79
  %98 = vmatprep.subr.bf16.mxu0 0
  %99 = vmatpush1.bf16.msra.mxu0 %v80
  %100 = vmatprep.subr.bf16.mxu0 0
  %101 = vmatpush1.bf16.msra.mxu0 %v81
  %102 = vmatprep.subr.bf16.mxu0 0
  %103 = vmatpush1.bf16.msra.mxu0 %v82
  %104 = vmatprep.subr.bf16.mxu0 0
  %105 = vmatpush1.bf16.msra.mxu0 %v83
  %106 = vmatprep.subr.bf16.mxu0 0
  %107 = vmatpush1.bf16.msra.mxu0 %v84
  %108 = vmatprep.subr.bf16.mxu0 0
  %109 = vmatpush1.bf16.msra.mxu0 %v85
  %110 = vmatprep.subr.bf16.mxu0 0
  %111 = vmatpush1.bf16.msra.mxu0 0
  %112 = vmatprep.subr.bf16.mxu0 0
  %113 = vmatpush1.bf16.msra.mxu0 0
  %114 = vmatprep.subr.bf16.mxu0 0
  %115 = vmatpush1.bf16.msra.mxu0 0
  %116 = vmatprep.subr.bf16.mxu0 0
  %117 = vmatpush1.bf16.msra.mxu0 0
  %118 = vmatprep.subr.bf16.mxu0 0
  %119 = vmatpush1.bf16.msra.mxu0 0
  %120 = vmatprep.subr.bf16.mxu0 0
  %121 = vmatpush1.bf16.msra.mxu0 0
  %122 = vmatprep.subr.bf16.mxu0 0
  %123 = vmatpush1.bf16.msra.mxu0 0
  %124 = vmatprep.subr.bf16.mxu0 0
  %125 = vmatpush1.bf16.msra.mxu0 0
  %126 = vmatprep.mubr.bf16.mxu0 0
  %127 = vmatmul.mubr.bf16.gmra.mrb[0].mxu0 %v27
  %v128 = vpop.f32.mrb[0].mxu0
  %v129 = vadd.f32 0.0, %v128
  %v130 = vpop.f32.mrb[0].mxu0
  %v131 = vpop.f32.mrb[0].mxu0
  %v132 = vadd.f32 0.0, %v131
  %v133 = vpop.f32.mrb[0].mxu0
  %134 = vdwg.mxu0
  %v135 = vadd.f32 %v44, %v129
  %v136 = vadd.f32 %v45, %v132
  %vm137 = vcmask 261120
  %138 = vst.msk [vmem:[#allocation2] sm:$0xff] %vm137, %v135
  %139 = vst.msk [vmem:[#allocation2 + $0x8] sm:$0xff] %vm137, %v136
  // Predicated region
  $region22: #{glm_forward.22} parent=0 // pred_check
    %p140 = pneg %p18
  $region23: #{glm_forward.22} parent=0 // pred_check_branch
    %142 = sbr.rel (%p140) target = $region25
  $region24: #{glm_forward.22} parent=0 // pred_region
    %v143 = vld [vmem:[#allocation2] sm:$0xff]
    %v144 = vld [vmem:[#allocation2 + $0x8] sm:$0xff]
    %v145 = vld [vmem:[%s2] sm:$0x1]
    %v147 = vlaneseq
    %v148 = vshrl.u32 %v147, 7
    %v149 = vsub.s32 0, %v148
    %v150 = vrot.slane %v145, %v149
    %v152 = vadd.f32 %v143, %v150
    %v153 = vadd.f32 %v144, %v150
    %v154 = vld [vmem:[%s3] sm:$0xff]
    %v155 = vld [vmem:[%s3 + $0x8] sm:$0xff]
    %v156 = vadd.f32 %v152, %v154
    %v157 = vadd.f32 %v153, %v155
    %158 = vst.msk [vmem:[%s4] sm:$0xff] %vm137, %v156
    %159 = vst.msk [vmem:[%s4 + $0x8] sm:$0xff] %vm137, %v157
  $region25: #{glm_forward.22} parent=0 // pred_fallthru
    _
  // Predicated region
  $region26: #{glm_forward.22} parent=0 // pred_check
    _
  $region27: #{glm_forward.22} parent=0 // pred_check_branch
    %161 = sbr.rel (0) target = $region29
  $region28: #{glm_forward.22} parent=0 // pred_region
    _
  $region29: #{glm_forward.22} parent=0 // pred_fallthru
    _
  // Predicated region
  $region30: #{glm_forward.22} parent=0 // pred_check
    _
  $region31: #{glm_forward.22} parent=0 // pred_check_branch
    %163 = sbr.rel (0) target = $region33
  $region32: #{glm_forward.22} parent=0 // pred_region
    _
  $region33: #{glm_forward.22} parent=0 // pred_fallthru
    _

</llo_original>
